<compile_context>
chip_gen: v7x
topology: tpu7x:2x2x1
jax: 0.10.0
libtpu: 0.0.40
codegen_flags: <defaults>
</compile_context>

<pallas_src>
import functools

import jax
import jax.numpy as jnp
from jax.experimental import pallas as pl
from jax.experimental.pallas import tpu as pltpu


def _round_up(n, m):
    return ((n + m - 1) // m) * m


def _conv1d_block_kernel(x_ref, w1_ref, b1_ref, g1_ref, be1_ref,
                         dw_ref, db_ref, g2_ref, be2_ref,
                         wsr_ref, bsr_ref, pw_ref,
                         res_ref, skip_ref, ypad_ref, *,
                         hid_chan, T_valid, K, dilation, pad, lpad, res_rows):
    f32 = jnp.float32
    T_pad = x_ref.shape[-1]
    hid_pad = dw_ref.shape[0]
    inv_n = 1.0 / float(hid_chan * T_valid)
    alpha = pw_ref[0]                     # scalar PReLU weight (SMEM)
    need_mask = T_valid < T_pad           # static fast path when time is exact

    if need_mask:
        lanes = jax.lax.broadcasted_iota(jnp.int32, (1, T_pad), 1)
        tmask = (lanes < T_valid).astype(f32)          # (1, T_pad) row mask

    def gln_mr(s1, s2):
        # single-pass statistics; clamp var >= 0 (guards f32 cancellation)
        m = s1 * inv_n
        var = jnp.maximum(s2 * inv_n - m * m, 0.0)
        return m, jax.lax.rsqrt(var + 1e-8)

    def prelu(v):
        return jnp.where(v > 0, v, alpha * v)

    # ---- 1x1 conv: one bf16 MXU matmul (f32 accumulate), bias fused ----
    y = jnp.dot(w1_ref[...], x_ref[...],
                preferred_element_type=f32) + b1_ref[...]      # [hid_pad, T_pad]

    # ---- gLN #1: padded time lanes of x are zero, so y there equals b1 per
    # channel -> remove their contribution analytically (no mask multiply) ----
    s1 = jnp.sum(y)
    s2 = jnp.sum(y * y)
    if need_mask:
        b1 = b1_ref[...]
        npad = float(T_pad - T_valid)
        s1 = s1 - npad * jnp.sum(b1)
        s2 = s2 - npad * jnp.sum(b1 * b1)
    m, r = gln_mr(s1, s2)
    y = prelu(g1_ref[...] * ((y - m) * r) + be1_ref[...])

    # ---- dilated depthwise conv: shifted static slices of a padded VMEM
    # scratch.  Only the two pad-wide borders are zeroed; the valid data is
    # stored at a 128-aligned offset (lpad) so the big store is unmasked. ----
    if pad > 0:
        ypad_ref[:, pl.ds(lpad - pad, pad)] = jnp.zeros((hid_pad, pad), f32)
        ypad_ref[:, pl.ds(lpad + T_pad, pad)] = jnp.zeros((hid_pad, pad), f32)
    ypad_ref[:, pl.ds(lpad, T_pad)] = (y * tmask) if need_mask else y

    dw = dw_ref[...]                                          # [hid_pad, K]
    acc = dw[:, 0:1] * ypad_ref[:, pl.ds(lpad - pad, T_pad)]
    for k in range(1, K):                                     # K is tiny (e.g. 3)
        acc = acc + dw[:, k:k + 1] * ypad_ref[:, pl.ds(lpad - pad + k * dilation,
                                                       T_pad)]
    y = acc + db_ref[...]

    # ---- gLN #2 (stats masked to valid lanes) + PReLU ----
    ym = (y * tmask) if need_mask else y
    m, r = gln_mr(jnp.sum(ym), jnp.sum(ym * ym))
    y = prelu(g2_ref[...] * ((y - m) * r) + be2_ref[...])

    # ---- fused residual + skip 1x1 convs: one bf16 MXU contraction ----
    sr = jnp.dot(wsr_ref[...], y.astype(jnp.bfloat16),
                 preferred_element_type=f32) + bsr_ref[...]
    res_ref[...] = sr[:res_rows]
    skip_ref[...] = sr[res_rows:]


def prepare_conv1d_block_params(params, *, prelu_weight=0.25):
    """Pad / fuse / bf16-cast the parameters ONCE (hoisted out of the forward)."""
    f32, bf16 = jnp.float32, jnp.bfloat16
    hid_chan, in_chan = params['w1'].shape
    skip_chan = params['ws'].shape[0]
    K = params['dw'].shape[1]
    # pad channel dims to multiples of 16 (safe sublane granularity for bf16)
    in_pad = _round_up(in_chan, 16)
    hid_pad = _round_up(hid_chan, 16)
    skip_pad = _round_up(skip_chan, 16)
    res_pad = _round_up(in_chan, 16)

    def pad2(a, r, c, dt):
        return jnp.pad(a.astype(f32),
                       ((0, r - a.shape[0]), (0, c - a.shape[1]))).astype(dt)

    def padcol(v, r):
        return jnp.pad(v.astype(f32), (0, r - v.shape[0]))[:, None]

    prep = dict(
        w1=pad2(params['w1'], hid_pad, in_pad, bf16),      # bf16 MXU operand
        b1=padcol(params['b1'], hid_pad),
        g1=padcol(params['g1'], hid_pad),
        be1=padcol(params['be1'], hid_pad),
        dw=jnp.pad(params['dw'].astype(f32), ((0, hid_pad - hid_chan), (0, 0))),
        db=padcol(params['db'], hid_pad),
        g2=padcol(params['g2'], hid_pad),
        be2=padcol(params['be2'], hid_pad),
        # residual-conv + skip-conv fused into one contraction over hid channels
        wsr=jnp.concatenate([pad2(params['wr'], res_pad, hid_pad, bf16),
                             pad2(params['ws'], skip_pad, hid_pad, bf16)], axis=0),
        bsr=jnp.concatenate([padcol(params['br'], res_pad),
                             padcol(params['bs'], skip_pad)], axis=0),
        pw=jnp.asarray([prelu_weight], dtype=f32),
    )
    meta = dict(in_chan=in_chan, hid_chan=hid_chan, skip_chan=skip_chan,
                in_pad=in_pad, hid_pad=hid_pad, skip_pad=skip_pad,
                res_pad=res_pad, kernel_size=K)
    return prep, meta


def conv1d_block_forward(x, prep, meta, *, dilation, padding,
                         causal=False, norm_type='gLN'):
    """Conv1DBlock forward. Returns (residual [B,in_chan,T], skip [B,skip,T])."""
    assert norm_type == 'gLN' and not causal, \
        "TODO(synk): only the gLN / non-causal path is implemented"
    assert meta['skip_chan'] > 0, "TODO(synk): skip_chan==0 branch not implemented"
    K = meta['kernel_size']
    assert 2 * padding == dilation * (K - 1)   # 'same'-length depthwise conv

    B, in_chan, T = x.shape
    assert in_chan == meta['in_chan']
    f32 = jnp.float32
    T_pad = _round_up(T, 128)                  # lane-dense time axis
    in_pad, hid_pad = meta['in_pad'], meta['hid_pad']
    res_pad, skip_pad = meta['res_pad'], meta['skip_pad']
    out_rows = res_pad + skip_pad
    lpad = _round_up(padding, 128)             # 128-aligned left margin
    ypad_w = T_pad + 2 * lpad

    xp = jnp.pad(x, ((0, 0), (0, in_pad - in_chan),
                     (0, T_pad - T))).astype(jnp.bfloat16)

    kernel = functools.partial(
        _conv1d_block_kernel, hid_chan=meta['hid_chan'], T_valid=T, K=K,
        dilation=dilation, pad=padding, lpad=lpad, res_rows=res_pad)

    def full(a):
        return pl.BlockSpec(a.shape, lambda b: (0,) * a.ndim)

    # Scoped-VMEM budget sized from the actual blocks (input/output double
    # buffers, depthwise scratch, weights, live f32 temporaries) + headroom.
    vmem_bytes = (2 * in_pad * T_pad * 2                    # bf16 input x2 bufs
                  + 2 * out_rows * T_pad * 4                # f32 outputs x2 bufs
                  + hid_pad * ypad_w * 4                    # depthwise scratch
                  + 2 * (hid_pad * in_pad + out_rows * hid_pad) * 2  # bf16 weights
                  + 4 * hid_pad * T_pad * 4)                # live f32 temporaries
    vmem_limit = min(max(int(vmem_bytes * 1.5) + (4 << 20), 16 << 20), 128 << 20)

    res, skip = pl.pallas_call(
        kernel,
        out_shape=(jax.ShapeDtypeStruct((B, res_pad, T_pad), f32),
                   jax.ShapeDtypeStruct((B, skip_pad, T_pad), f32)),
        grid=(B,),
        in_specs=[pl.BlockSpec((None, in_pad, T_pad), lambda b: (b, 0, 0)),
                  full(prep['w1']), full(prep['b1']), full(prep['g1']),
                  full(prep['be1']), full(prep['dw']), full(prep['db']),
                  full(prep['g2']), full(prep['be2']),
                  full(prep['wsr']), full(prep['bsr']),
                  pl.BlockSpec(memory_space=pltpu.MemorySpace.SMEM)],
        out_specs=(pl.BlockSpec((None, res_pad, T_pad), lambda b: (b, 0, 0)),
                   pl.BlockSpec((None, skip_pad, T_pad), lambda b: (b, 0, 0))),
        scratch_shapes=[pltpu.VMEM((hid_pad, ypad_w), f32)],
        compiler_params=pltpu.CompilerParams(
            dimension_semantics=("parallel",),    # batch across TCs on v7x
            vmem_limit_bytes=vmem_limit),
    )(xp, prep['w1'], prep['b1'], prep['g1'], prep['be1'],
      prep['dw'], prep['db'], prep['g2'], prep['be2'],
      prep['wsr'], prep['bsr'], prep['pw'])

    if res_pad != in_chan or T_pad != T:
        res = res[:, :in_chan, :T]
    if skip_pad != meta['skip_chan'] or T_pad != T:
        skip = skip[:, :meta['skip_chan'], :T]
    return res, skip


def reference_forward(x, p, *, kernel_size, dilation, padding, prelu_weight=0.25):
    """Pure-JAX f32 reference mirroring the PyTorch Conv1DBlock (gLN, non-causal)."""
    def conv1x1(w, b, y):
        return jnp.einsum('oi,bit->bot', w, y) + b[None, :, None]

    def gln(y, g, beta):
        m = jnp.mean(y, axis=(1, 2), keepdims=True)
        v = jnp.mean((y - m) ** 2, axis=(1, 2), keepdims=True)
        return g[None, :, None] * (y - m) / jnp.sqrt(v + 1e-8) + beta[None, :, None]

    def prelu(y):
        return jnp.where(y > 0, y, prelu_weight * y)

    B, _, T = x.shape
    y = prelu(gln(conv1x1(p['w1'], p['b1'], x), p['g1'], p['be1']))
    yp = jnp.pad(y, ((0, 0), (0, 0), (padding, padding)))
    acc = sum(p['dw'][None, :, k, None] * yp[:, :, k * dilation:k * dilation + T]
              for k in range(kernel_size))
    y = acc + p['db'][None, :, None]
    y = prelu(gln(y, p['g2'], p['be2']))
    skip = conv1x1(p['ws'], p['bs'], y)
    residual = conv1x1(p['wr'], p['br'], y)
    return residual, skip


if __name__ == "__main__":
    # Small config consistent with Conv1DBlock (odd kernel, 'same' padding).
    B, in_chan, T = 2, 20, 50
    hid_chan, skip_chan = 28, 12
    kernel_size, dilation = 3, 4
    padding = (kernel_size - 1) * dilation // 2

    key = jax.random.PRNGKey(0)
    ks = jax.random.split(key, 16)

    def nrm(k, shape, s=0.1):
        return (s * jax.random.normal(k, shape)).astype(jnp.float32)

    params = dict(
        w1=nrm(ks[0], (hid_chan, in_chan)),           # conv1x1 weight [hid, in]
        b1=nrm(ks[1], (hid_chan,)),
        g1=1.0 + nrm(ks[2], (hid_chan,)),             # gLN gamma/beta
        be1=nrm(ks[3], (hid_chan,)),
        dw=nrm(ks[4], (hid_chan, kernel_size)),       # depthwise weight [hid, K]
        db=nrm(ks[5], (hid_chan,)),
        g2=1.0 + nrm(ks[6], (hid_chan,)),
        be2=nrm(ks[7], (hid_chan,)),
        ws=nrm(ks[8], (skip_chan, hid_chan)),         # skip conv
        bs=nrm(ks[9], (skip_chan,)),
        wr=nrm(ks[10], (in_chan, hid_chan)),          # residual conv
        br=nrm(ks[11], (in_chan,)),
    )
    x = jax.random.normal(ks[12], (B, in_chan, T), jnp.float32)

    prep, meta = prepare_conv1d_block_params(params)   # hoisted: once per model
    res, skip = conv1d_block_forward(x, prep, meta,
                                     dilation=dilation, padding=padding)
    res, skip = jax.block_until_ready((res, skip))

    assert res.shape == (B, in_chan, T)
    assert skip.shape == (B, skip_chan, T)

    res_ref, skip_ref = reference_forward(x, params, kernel_size=kernel_size,
                                          dilation=dilation, padding=padding)
    max_err = max(float(jnp.max(jnp.abs(res - res_ref))),
                  float(jnp.max(jnp.abs(skip - skip_ref))))
    # Tolerance reflects the intentional bf16 MXU inputs (f32 reference).
    if max_err > 3e-2:
        raise AssertionError(f"kernel/reference mismatch, max abs err = {max_err}")

    print("KERNEL_OK")
</pallas_src>

<mosaic_0001>
module attributes {stable_mosaic.version = 11 : i64} {
  func.func @_conv1d_block_kernel(%arg0: i32, %arg1: memref<1x32x128xbf16, #tpu.memory_space<vmem>>, %arg2: memref<32x32xbf16, #tpu.memory_space<vmem>>, %arg3: memref<32x1xf32, #tpu.memory_space<vmem>>, %arg4: memref<32x1xf32, #tpu.memory_space<vmem>>, %arg5: memref<32x1xf32, #tpu.memory_space<vmem>>, %arg6: memref<32x3xf32, #tpu.memory_space<vmem>>, %arg7: memref<32x1xf32, #tpu.memory_space<vmem>>, %arg8: memref<32x1xf32, #tpu.memory_space<vmem>>, %arg9: memref<32x1xf32, #tpu.memory_space<vmem>>, %arg10: memref<48x32xbf16, #tpu.memory_space<vmem>>, %arg11: memref<48x1xf32, #tpu.memory_space<vmem>>, %arg12: memref<1xf32, #tpu.memory_space<smem>>, %arg13: memref<1x32x128xf32, #tpu.memory_space<vmem>>, %arg14: memref<1x16x128xf32, #tpu.memory_space<vmem>>, %arg15: memref<32x384xf32, #tpu.memory_space<vmem>>) attributes {dimension_semantics = [#tpu.dimension_semantics<parallel>], iteration_bounds = array<i64: 2>, scalar_prefetch = 0 : i64, scratch_operands = 1 : i64, tpu.core_type = #tpu.core_type<tc>, window_params = [{transform_indices = @transform_0, window_bounds = array<i64: 1, 32, 128>}, {pipeline_mode = #tpu.pipeline_mode<synchronous>, transform_indices = @transform_1, window_bounds = array<i64: 32, 32>}, {pipeline_mode = #tpu.pipeline_mode<synchronous>, transform_indices = @transform_2, window_bounds = array<i64: 32, 1>}, {pipeline_mode = #tpu.pipeline_mode<synchronous>, transform_indices = @transform_3, window_bounds = array<i64: 32, 1>}, {pipeline_mode = #tpu.pipeline_mode<synchronous>, transform_indices = @transform_4, window_bounds = array<i64: 32, 1>}, {pipeline_mode = #tpu.pipeline_mode<synchronous>, transform_indices = @transform_5, window_bounds = array<i64: 32, 3>}, {pipeline_mode = #tpu.pipeline_mode<synchronous>, transform_indices = @transform_6, window_bounds = array<i64: 32, 1>}, {pipeline_mode = #tpu.pipeline_mode<synchronous>, transform_indices = @transform_7, window_bounds = array<i64: 32, 1>}, {pipeline_mode = #tpu.pipeline_mode<synchronous>, transform_indices = @transform_8, window_bounds = array<i64: 32, 1>}, {pipeline_mode = #tpu.pipeline_mode<synchronous>, transform_indices = @transform_9, window_bounds = array<i64: 48, 32>}, {pipeline_mode = #tpu.pipeline_mode<synchronous>, transform_indices = @transform_10, window_bounds = array<i64: 48, 1>}, {transform_indices = @transform_11, window_bounds = array<i64: 1>}, {transform_indices = @transform_12, window_bounds = array<i64: 1, 32, 128>}, {transform_indices = @transform_13, window_bounds = array<i64: 1, 16, 128>}]} {
    %c0 = arith.constant 0 : index
    %0 = memref.load %arg12[%c0] : memref<1xf32, #tpu.memory_space<smem>>
    %1 = tpu.iota {dimensions = array<i32: 1>} : vector<1x128xi32>
    %c50_i32 = arith.constant 50 : i32
    %2 = vector.broadcast %c50_i32 : i32 to vector<1x128xi32>
    %3 = arith.cmpi slt, %1, %2 : vector<1x128xi32>
    %4 = arith.extui %3 : vector<1x128xi1> to vector<1x128xi32>
    %5 = arith.sitofp %4 : vector<1x128xi32> to vector<1x128xf32>
    %c0_0 = arith.constant 0 : index
    %c0_1 = arith.constant 0 : index
    %6 = vector.load %arg2[%c0_0, %c0_1] : memref<32x32xbf16, #tpu.memory_space<vmem>>, vector<32x32xbf16>
    %c0_2 = arith.constant 0 : index
    %c0_3 = arith.constant 0 : index
    %c0_4 = arith.constant 0 : index
    %7 = vector.load %arg1[%c0_2, %c0_3, %c0_4] : memref<1x32x128xbf16, #tpu.memory_space<vmem>>, vector<1x32x128xbf16>
    %8 = vector.shape_cast %7 : vector<1x32x128xbf16> to vector<32x128xbf16>
    %cst = arith.constant dense<0.000000e+00> : vector<32x128xf32>
    %9 = tpu.matmul %6, %8, %cst {dimension_numbers = #tpu.dot_dimension_numbers<[1], [0], [0], [1], [0, 0, 1, 1], [], []>} : vector<32x32xbf16>, vector<32x128xbf16>, vector<32x128xf32> -> vector<32x128xf32>
    %c0_5 = arith.constant 0 : index
    %c0_6 = arith.constant 0 : index
    %10 = vector.load %arg3[%c0_5, %c0_6] : memref<32x1xf32, #tpu.memory_space<vmem>>, vector<32x1xf32>
    %11 = vector.broadcast %10 : vector<32x1xf32> to vector<32x128xf32>
    %12 = arith.addf %9, %11 : vector<32x128xf32>
    %13 = vector.shape_cast %12 : vector<32x128xf32> to vector<1x32x128xf32>
    %cst_7 = arith.constant dense<0.000000e+00> : vector<1xf32>
    %14 = vector.multi_reduction <add>, %13, %cst_7 [1, 2] : vector<1x32x128xf32> to vector<1xf32>
    %15 = vector.shape_cast %14 : vector<1xf32> to vector<1x1x1xf32>
    %16 = vector.extract %15[0, 0, 0] : f32 from vector<1x1x1xf32>
    %17 = arith.mulf %12, %12 : vector<32x128xf32>
    %18 = vector.shape_cast %17 : vector<32x128xf32> to vector<1x32x128xf32>
    %cst_8 = arith.constant dense<0.000000e+00> : vector<1xf32>
    %19 = vector.multi_reduction <add>, %18, %cst_8 [1, 2] : vector<1x32x128xf32> to vector<1xf32>
    %20 = vector.shape_cast %19 : vector<1xf32> to vector<1x1x1xf32>
    %21 = vector.extract %20[0, 0, 0] : f32 from vector<1x1x1xf32>
    %c0_9 = arith.constant 0 : index
    %c0_10 = arith.constant 0 : index
    %22 = vector.load %arg3[%c0_9, %c0_10] : memref<32x1xf32, #tpu.memory_space<vmem>>, vector<32x1xf32>
    %23 = vector.shape_cast %22 : vector<32x1xf32> to vector<1x32x1xf32>
    %cst_11 = arith.constant dense<0.000000e+00> : vector<1xf32>
    %24 = vector.multi_reduction <add>, %23, %cst_11 [1, 2] : vector<1x32x1xf32> to vector<1xf32>
    %25 = vector.shape_cast %24 : vector<1xf32> to vector<1x1x1xf32>
    %26 = vector.extract %25[0, 0, 0] : f32 from vector<1x1x1xf32>
    %cst_12 = arith.constant 7.800000e+01 : f32
    %27 = arith.mulf %cst_12, %26 : f32
    %28 = arith.subf %16, %27 : f32
    %29 = arith.mulf %22, %22 : vector<32x1xf32>
    %30 = vector.shape_cast %29 : vector<32x1xf32> to vector<1x32x1xf32>
    %cst_13 = arith.constant dense<0.000000e+00> : vector<1xf32>
    %31 = vector.multi_reduction <add>, %30, %cst_13 [1, 2] : vector<1x32x1xf32> to vector<1xf32>
    %32 = vector.shape_cast %31 : vector<1xf32> to vector<1x1x1xf32>
    %33 = vector.extract %32[0, 0, 0] : f32 from vector<1x1x1xf32>
    %cst_14 = arith.constant 7.800000e+01 : f32
    %34 = arith.mulf %cst_14, %33 : f32
    %35 = arith.subf %21, %34 : f32
    %cst_15 = arith.constant 7.14285707E-4 : f32
    %36 = arith.mulf %28, %cst_15 : f32
    %cst_16 = arith.constant 7.14285707E-4 : f32
    %37 = arith.mulf %35, %cst_16 : f32
    %38 = arith.mulf %36, %36 : f32
    %39 = arith.subf %37, %38 : f32
    %cst_17 = arith.constant 0.000000e+00 : f32
    %40 = arith.maximumf %39, %cst_17 : f32
    %cst_18 = arith.constant 9.99999993E-9 : f32
    %41 = arith.addf %40, %cst_18 : f32
    %42 = math.rsqrt %41 : f32
    %c0_19 = arith.constant 0 : index
    %c0_20 = arith.constant 0 : index
    %43 = vector.load %arg4[%c0_19, %c0_20] : memref<32x1xf32, #tpu.memory_space<vmem>>, vector<32x1xf32>
    %44 = vector.broadcast %36 : f32 to vector<32x128xf32>
    %45 = arith.subf %12, %44 : vector<32x128xf32>
    %46 = vector.broadcast %42 : f32 to vector<32x128xf32>
    %47 = arith.mulf %45, %46 : vector<32x128xf32>
    %48 = vector.broadcast %43 : vector<32x1xf32> to vector<32x128xf32>
    %49 = arith.mulf %48, %47 : vector<32x128xf32>
    %c0_21 = arith.constant 0 : index
    %c0_22 = arith.constant 0 : index
    %50 = vector.load %arg5[%c0_21, %c0_22] : memref<32x1xf32, #tpu.memory_space<vmem>>, vector<32x1xf32>
    %51 = vector.broadcast %50 : vector<32x1xf32> to vector<32x128xf32>
    %52 = arith.addf %49, %51 : vector<32x128xf32>
    %cst_23 = arith.constant 0.000000e+00 : f32
    %53 = vector.broadcast %cst_23 : f32 to vector<32x128xf32>
    %54 = arith.cmpf ogt, %52, %53 : vector<32x128xf32>
    %55 = vector.broadcast %0 : f32 to vector<32x128xf32>
    %56 = arith.mulf %55, %52 : vector<32x128xf32>
    %57 = arith.select %54, %52, %56 : vector<32x128xi1>, vector<32x128xf32>
    %cst_24 = arith.constant 0.000000e+00 : f32
    %58 = vector.broadcast %cst_24 : f32 to vector<32x4xf32>
    %c0_25 = arith.constant 0 : index
    %c124 = arith.constant 124 : index
    %59 = vector.load %arg15[%c0_25, %c124] : memref<32x384xf32, #tpu.memory_space<vmem>>, vector<32x4xf32>
    tpu.vector_store %arg15[%c0_25, %c124], %58 {strides = array<i32>} : memref<32x384xf32, #tpu.memory_space<vmem>>, vector<32x4xf32>,
    %cst_26 = arith.constant 0.000000e+00 : f32
    %60 = vector.broadcast %cst_26 : f32 to vector<32x4xf32>
    %c0_27 = arith.constant 0 : index
    %c256 = arith.constant 256 : index
    %61 = vector.load %arg15[%c0_27, %c256] : memref<32x384xf32, #tpu.memory_space<vmem>>, vector<32x4xf32>
    tpu.vector_store %arg15[%c0_27, %c256], %60 {strides = array<i32>} : memref<32x384xf32, #tpu.memory_space<vmem>>, vector<32x4xf32>,
    %62 = vector.broadcast %5 : vector<1x128xf32> to vector<32x128xf32>
    %63 = arith.mulf %57, %62 : vector<32x128xf32>
    %c0_28 = arith.constant 0 : index
    %c128 = arith.constant 128 : index
    %64 = vector.load %arg15[%c0_28, %c128] : memref<32x384xf32, #tpu.memory_space<vmem>>, vector<32x128xf32>
    tpu.vector_store %arg15[%c0_28, %c128], %63 {strides = array<i32>} : memref<32x384xf32, #tpu.memory_space<vmem>>, vector<32x128xf32>,
    %c0_29 = arith.constant 0 : index
    %c0_30 = arith.constant 0 : index
    %65 = vector.load %arg6[%c0_29, %c0_30] : memref<32x3xf32, #tpu.memory_space<vmem>>, vector<32x3xf32>
    %66 = vector.extract_strided_slice %65 {offsets = [0, 0], sizes = [32, 1], strides = [1, 1]} : vector<32x3xf32> to vector<32x1xf32>
    %c0_31 = arith.constant 0 : index
    %c124_32 = arith.constant 124 : index
    %67 = vector.load %arg15[%c0_31, %c124_32] : memref<32x384xf32, #tpu.memory_space<vmem>>, vector<32x128xf32>
    %68 = vector.broadcast %66 : vector<32x1xf32> to vector<32x128xf32>
    %69 = arith.mulf %68, %67 : vector<32x128xf32>
    %70 = vector.extract_strided_slice %65 {offsets = [0, 1], sizes = [32, 1], strides = [1, 1]} : vector<32x3xf32> to vector<32x1xf32>
    %c0_33 = arith.constant 0 : index
    %c128_34 = arith.constant 128 : index
    %71 = vector.load %arg15[%c0_33, %c128_34] : memref<32x384xf32, #tpu.memory_space<vmem>>, vector<32x128xf32>
    %72 = vector.broadcast %70 : vector<32x1xf32> to vector<32x128xf32>
    %73 = arith.mulf %72, %71 : vector<32x128xf32>
    %74 = arith.addf %69, %73 : vector<32x128xf32>
    %75 = vector.extract_strided_slice %65 {offsets = [0, 2], sizes = [32, 1], strides = [1, 1]} : vector<32x3xf32> to vector<32x1xf32>
    %c0_35 = arith.constant 0 : index
    %c132 = arith.constant 132 : index
    %76 = vector.load %arg15[%c0_35, %c132] : memref<32x384xf32, #tpu.memory_space<vmem>>, vector<32x128xf32>
    %77 = vector.broadcast %75 : vector<32x1xf32> to vector<32x128xf32>
    %78 = arith.mulf %77, %76 : vector<32x128xf32>
    %79 = arith.addf %74, %78 : vector<32x128xf32>
    %c0_36 = arith.constant 0 : index
    %c0_37 = arith.constant 0 : index
    %80 = vector.load %arg7[%c0_36, %c0_37] : memref<32x1xf32, #tpu.memory_space<vmem>>, vector<32x1xf32>
    %81 = vector.broadcast %80 : vector<32x1xf32> to vector<32x128xf32>
    %82 = arith.addf %79, %81 : vector<32x128xf32>
    %83 = vector.broadcast %5 : vector<1x128xf32> to vector<32x128xf32>
    %84 = arith.mulf %82, %83 : vector<32x128xf32>
    %85 = vector.shape_cast %84 : vector<32x128xf32> to vector<1x32x128xf32>
    %cst_38 = arith.constant dense<0.000000e+00> : vector<1xf32>
    %86 = vector.multi_reduction <add>, %85, %cst_38 [1, 2] : vector<1x32x128xf32> to vector<1xf32>
    %87 = vector.shape_cast %86 : vector<1xf32> to vector<1x1x1xf32>
    %88 = vector.extract %87[0, 0, 0] : f32 from vector<1x1x1xf32>
    %89 = arith.mulf %84, %84 : vector<32x128xf32>
    %90 = vector.shape_cast %89 : vector<32x128xf32> to vector<1x32x128xf32>
    %cst_39 = arith.constant dense<0.000000e+00> : vector<1xf32>
    %91 = vector.multi_reduction <add>, %90, %cst_39 [1, 2] : vector<1x32x128xf32> to vector<1xf32>
    %92 = vector.shape_cast %91 : vector<1xf32> to vector<1x1x1xf32>
    %93 = vector.extract %92[0, 0, 0] : f32 from vector<1x1x1xf32>
    %cst_40 = arith.constant 7.14285707E-4 : f32
    %94 = arith.mulf %88, %cst_40 : f32
    %cst_41 = arith.constant 7.14285707E-4 : f32
    %95 = arith.mulf %93, %cst_41 : f32
    %96 = arith.mulf %94, %94 : f32
    %97 = arith.subf %95, %96 : f32
    %cst_42 = arith.constant 0.000000e+00 : f32
    %98 = arith.maximumf %97, %cst_42 : f32
    %cst_43 = arith.constant 9.99999993E-9 : f32
    %99 = arith.addf %98, %cst_43 : f32
    %100 = math.rsqrt %99 : f32
    %c0_44 = arith.constant 0 : index
    %c0_45 = arith.constant 0 : index
    %101 = vector.load %arg8[%c0_44, %c0_45] : memref<32x1xf32, #tpu.memory_space<vmem>>, vector<32x1xf32>
    %102 = vector.broadcast %94 : f32 to vector<32x128xf32>
    %103 = arith.subf %82, %102 : vector<32x128xf32>
    %104 = vector.broadcast %100 : f32 to vector<32x128xf32>
    %105 = arith.mulf %103, %104 : vector<32x128xf32>
    %106 = vector.broadcast %101 : vector<32x1xf32> to vector<32x128xf32>
    %107 = arith.mulf %106, %105 : vector<32x128xf32>
    %c0_46 = arith.constant 0 : index
    %c0_47 = arith.constant 0 : index
    %108 = vector.load %arg9[%c0_46, %c0_47] : memref<32x1xf32, #tpu.memory_space<vmem>>, vector<32x1xf32>
    %109 = vector.broadcast %108 : vector<32x1xf32> to vector<32x128xf32>
    %110 = arith.addf %107, %109 : vector<32x128xf32>
    %cst_48 = arith.constant 0.000000e+00 : f32
    %111 = vector.broadcast %cst_48 : f32 to vector<32x128xf32>
    %112 = arith.cmpf ogt, %110, %111 : vector<32x128xf32>
    %113 = vector.broadcast %0 : f32 to vector<32x128xf32>
    %114 = arith.mulf %113, %110 : vector<32x128xf32>
    %115 = arith.select %112, %110, %114 : vector<32x128xi1>, vector<32x128xf32>
    %c0_49 = arith.constant 0 : index
    %c0_50 = arith.constant 0 : index
    %116 = vector.load %arg10[%c0_49, %c0_50] : memref<48x32xbf16, #tpu.memory_space<vmem>>, vector<48x32xbf16>
    %117 = arith.truncf %115 : vector<32x128xf32> to vector<32x128xbf16>
    %cst_51 = arith.constant dense<0.000000e+00> : vector<48x128xf32>
    %118 = tpu.matmul %116, %117, %cst_51 {dimension_numbers = #tpu.dot_dimension_numbers<[1], [0], [0], [1], [0, 0, 1, 1], [], []>} : vector<48x32xbf16>, vector<32x128xbf16>, vector<48x128xf32> -> vector<48x128xf32>
    %c0_52 = arith.constant 0 : index
    %c0_53 = arith.constant 0 : index
    %119 = vector.load %arg11[%c0_52, %c0_53] : memref<48x1xf32, #tpu.memory_space<vmem>>, vector<48x1xf32>
    %120 = vector.broadcast %119 : vector<48x1xf32> to vector<48x128xf32>
    %121 = arith.addf %118, %120 : vector<48x128xf32>
    %122 = vector.extract_strided_slice %121 {offsets = [0, 0], sizes = [32, 128], strides = [1, 1]} : vector<48x128xf32> to vector<32x128xf32>
    %c0_54 = arith.constant 0 : index
    %c0_55 = arith.constant 0 : index
    %c0_56 = arith.constant 0 : index
    %123 = vector.load %arg13[%c0_54, %c0_55, %c0_56] : memref<1x32x128xf32, #tpu.memory_space<vmem>>, vector<1x32x128xf32>
    %124 = vector.shape_cast %123 : vector<1x32x128xf32> to vector<32x128xf32>
    %125 = vector.shape_cast %122 : vector<32x128xf32> to vector<1x32x128xf32>
    tpu.vector_store %arg13[%c0_54, %c0_55, %c0_56], %125 {strides = array<i32>} : memref<1x32x128xf32, #tpu.memory_space<vmem>>, vector<1x32x128xf32>,
    %126 = vector.extract_strided_slice %121 {offsets = [32, 0], sizes = [16, 128], strides = [1, 1]} : vector<48x128xf32> to vector<16x128xf32>
    %c0_57 = arith.constant 0 : index
    %c0_58 = arith.constant 0 : index
    %c0_59 = arith.constant 0 : index
    %127 = vector.load %arg14[%c0_57, %c0_58, %c0_59] : memref<1x16x128xf32, #tpu.memory_space<vmem>>, vector<1x16x128xf32>
    %128 = vector.shape_cast %127 : vector<1x16x128xf32> to vector<16x128xf32>
    %129 = vector.shape_cast %126 : vector<16x128xf32> to vector<1x16x128xf32>
    tpu.vector_store %arg14[%c0_57, %c0_58, %c0_59], %129 {strides = array<i32>} : memref<1x16x128xf32, #tpu.memory_space<vmem>>, vector<1x16x128xf32>,
    return
  }
  func.func @transform_0(%arg0: i32) -> (i32, i32, i32) {
    %c0_i32 = arith.constant 0 : i32
    %c0_i32_0 = arith.constant 0 : i32
    %c0_i32_1 = arith.constant 0 : i32
    return %arg0, %c0_i32, %c0_i32_0 : i32, i32, i32
  }
  func.func @transform_1(%arg0: i32) -> (i32, i32) {
    %c0_i32 = arith.constant 0 : i32
    %c0_i32_0 = arith.constant 0 : i32
    %c0_i32_1 = arith.constant 0 : i32
    return %c0_i32, %c0_i32_0 : i32, i32
  }
  func.func @transform_2(%arg0: i32) -> (i32, i32) {
    %c0_i32 = arith.constant 0 : i32
    %c0_i32_0 = arith.constant 0 : i32
    %c0_i32_1 = arith.constant 0 : i32
    return %c0_i32, %c0_i32_0 : i32, i32
  }
  func.func @transform_3(%arg0: i32) -> (i32, i32) {
    %c0_i32 = arith.constant 0 : i32
    %c0_i32_0 = arith.constant 0 : i32
    %c0_i32_1 = arith.constant 0 : i32
    return %c0_i32, %c0_i32_0 : i32, i32
  }
  func.func @transform_4(%arg0: i32) -> (i32, i32) {
    %c0_i32 = arith.constant 0 : i32
    %c0_i32_0 = arith.constant 0 : i32
    %c0_i32_1 = arith.constant 0 : i32
    return %c0_i32, %c0_i32_0 : i32, i32
  }
  func.func @transform_5(%arg0: i32) -> (i32, i32) {
    %c0_i32 = arith.constant 0 : i32
    %c0_i32_0 = arith.constant 0 : i32
    %c0_i32_1 = arith.constant 0 : i32
    return %c0_i32, %c0_i32_0 : i32, i32
  }
  func.func @transform_6(%arg0: i32) -> (i32, i32) {
    %c0_i32 = arith.constant 0 : i32
    %c0_i32_0 = arith.constant 0 : i32
    %c0_i32_1 = arith.constant 0 : i32
    return %c0_i32, %c0_i32_0 : i32, i32
  }
  func.func @transform_7(%arg0: i32) -> (i32, i32) {
    %c0_i32 = arith.constant 0 : i32
    %c0_i32_0 = arith.constant 0 : i32
    %c0_i32_1 = arith.constant 0 : i32
    return %c0_i32, %c0_i32_0 : i32, i32
  }
  func.func @transform_8(%arg0: i32) -> (i32, i32) {
    %c0_i32 = arith.constant 0 : i32
    %c0_i32_0 = arith.constant 0 : i32
    %c0_i32_1 = arith.constant 0 : i32
    return %c0_i32, %c0_i32_0 : i32, i32
  }
  func.func @transform_9(%arg0: i32) -> (i32, i32) {
    %c0_i32 = arith.constant 0 : i32
    %c0_i32_0 = arith.constant 0 : i32
    %c0_i32_1 = arith.constant 0 : i32
    return %c0_i32, %c0_i32_0 : i32, i32
  }
  func.func @transform_10(%arg0: i32) -> (i32, i32) {
    %c0_i32 = arith.constant 0 : i32
    %c0_i32_0 = arith.constant 0 : i32
    %c0_i32_1 = arith.constant 0 : i32
    return %c0_i32, %c0_i32_0 : i32, i32
  }
  func.func @transform_11(%arg0: i32) -> i32 {
    %c0_i32 = arith.constant 0 : i32
    %c0_i32_0 = arith.constant 0 : i32
    return %c0_i32 : i32
  }
  func.func @transform_12(%arg0: i32) -> (i32, i32, i32) {
    %c0_i32 = arith.constant 0 : i32
    %c0_i32_0 = arith.constant 0 : i32
    %c0_i32_1 = arith.constant 0 : i32
    return %arg0, %c0_i32, %c0_i32_0 : i32, i32, i32
  }
  func.func @transform_13(%arg0: i32) -> (i32, i32, i32) {
    %c0_i32 = arith.constant 0 : i32
    %c0_i32_0 = arith.constant 0 : i32
    %c0_i32_1 = arith.constant 0 : i32
    return %arg0, %c0_i32, %c0_i32_0 : i32, i32, i32
  }
}

</mosaic_0001>

<llo_original>
// kernel: tpu_custom_call.1
$region0: #{tpu_custom_call.1}
  #allocation0 [shape = 'u32[]', space=smem, size = 0x4, offset = 0x4, fixed_abs, tag = 'smem constant byte address 0x4 - core index']
  #allocation1 [shape = 'u32[144,128]{1,0:T(1,128)}', space=vmem, size = 0x12000, scoped, tag = 'internal scratch']
  #allocation2 [shape = 'f32[32,384]{1,0:T(8,128)}', space=vmem, size = 0xc000, scoped, tag = 'scratch operand']
  #allocation3 [shape = 'f32[1]{0:T(128)S(6)}', space=smem, size = 0x200, scoped, tag = 'scoped memory for tpu_custom_call.1']
  %s0 = inlined_call_operand.vmem [shape: bf16[2,32,128], index: 0, kind: input, shape index: {}]
  %s1 = inlined_call_operand.vmem [shape: bf16[32,32], index: 1, kind: input, shape index: {}]
  %s2 = inlined_call_operand.vmem [shape: f32[32,1], index: 2, kind: input, shape index: {}]
  %s3 = inlined_call_operand.vmem [shape: f32[32,1], index: 3, kind: input, shape index: {}]
  %s4 = inlined_call_operand.vmem [shape: f32[32,1], index: 4, kind: input, shape index: {}]
  %s5 = inlined_call_operand.vmem [shape: f32[32,3], index: 5, kind: input, shape index: {}]
  %s6 = inlined_call_operand.vmem [shape: f32[32,1], index: 6, kind: input, shape index: {}]
  %s7 = inlined_call_operand.vmem [shape: f32[32,1], index: 7, kind: input, shape index: {}]
  %s8 = inlined_call_operand.vmem [shape: f32[32,1], index: 8, kind: input, shape index: {}]
  %s9 = inlined_call_operand.vmem [shape: bf16[48,32], index: 9, kind: input, shape index: {}]
  %s10 = inlined_call_operand.vmem [shape: f32[48,1], index: 10, kind: input, shape index: {}]
  %s11 = inlined_call_operand.<no memory space> [shape: f32[1], index: 11, kind: input, shape index: {}]
  %s12 = inlined_call_operand.hbm [shape: f32[2,32,128], index: 12, kind: output, shape index: {0}]
  %s13 = inlined_call_operand.hbm [shape: f32[2,16,128], index: 13, kind: output, shape index: {1}]
  %14 = xla_tuple %s12, %s13
  %s15 = sld [smem:[#allocation0]]
  $region89: #{tpu_custom_call.1} parent=0
    _
  %s17 = ssub.s32 1, %s15
  %s18 = scalar_select 0, %s17, %s15
  %19 = sst [smem:[#allocation3]] %s11
  $region1: #{tpu_custom_call.1} parent=0
    #allocation4 [shape = 'u8[32768]{0}', space=vmem, size = 0x8000, scoped, tag = 'output window, operand 0']
    #allocation5 [shape = 's32[2]{0}', space=sflag, size = 0x8, scoped, tag = 'scoped memory for tpu_custom_call.1']
    #allocation6 [shape = 'u8[16384]{0}', space=vmem, size = 0x4000, scoped, tag = 'output window, operand 1']
    #allocation7 [shape = 's32[2]{0}', space=sflag, size = 0x8, scoped, tag = 'scoped memory for tpu_custom_call.1']
    %20 = vsyncpa [#allocation5], 0
    %s21 = scalar_lea.sflag [#allocation5], 1
    %22 = vsyncpa %s21, 0
    %23 = vsyncpa [#allocation7], 0
    %s24 = scalar_lea.sflag [#allocation7], 1
    %25 = vsyncpa %s24, 0
    loop: start=0, step=1, limit=4
    $region2: #{tpu_custom_call.1} parent=1 // loop_pre_header
      _
    $region3: #{tpu_custom_call.1} parent=1 // loop_header
      %s27 = sphi 0, %s31
      %p28 = scmp.ge.s32.totalorder %s27, 4
      %s37 = sphi 0, %s39
      %s40 = sphi 0, %s37
      %s41 = sphi 0, %s40
      %s57 = sphi 0, %s41
      %s61 = sphi 0, %s61
      %s63 = sphi 0, %s61
      %s64 = sphi 0, %s63
      %s78 = sphi 0, %s64
      %s82 = sphi 0, %s82
      %s84 = sphi 0, %s82
      %s85 = sphi 0, %s84
      %s99 = sphi 0, %s85
      %s103 = sphi 0, %s103
      %s105 = sphi 0, %s103
      %s106 = sphi 0, %s105
      %s120 = sphi 0, %s106
      %s124 = sphi 0, %s124
      %s126 = sphi 0, %s124
      %s127 = sphi 0, %s126
      %s141 = sphi 0, %s127
      %s145 = sphi 0, %s145
      %s147 = sphi 0, %s145
      %s148 = sphi 0, %s147
      %s162 = sphi 0, %s148
      %s166 = sphi 0, %s166
      %s168 = sphi 0, %s166
      %s169 = sphi 0, %s168
      %s183 = sphi 0, %s169
      %s187 = sphi 0, %s187
      %s189 = sphi 0, %s187
      %s190 = sphi 0, %s189
      %s204 = sphi 0, %s190
      %s208 = sphi 0, %s208
      %s210 = sphi 0, %s208
      %s211 = sphi 0, %s210
      %s225 = sphi 0, %s211
      %s229 = sphi 0, %s229
      %s231 = sphi 0, %s229
      %s232 = sphi 0, %s231
      %s246 = sphi 0, %s232
      %s250 = sphi 0, %s250
      %s252 = sphi 0, %s250
      %s253 = sphi 0, %s252
      %s267 = sphi 0, %s253
      %s271 = sphi 0, %s271
      %s273 = sphi 0, %s271
      %s274 = sphi 0, %s273
      %s288 = sphi 0, %s274
      %s294 = sphi 0, %s296
      %s297 = sphi 0, %s294
      %s298 = sphi 0, %s297
      %s314 = sphi 0, %s298
      %s320 = sphi 0, %s322
      %s323 = sphi 0, %s320
      %s324 = sphi 0, %s323
      %s340 = sphi 0, %s324
    $region4: #{tpu_custom_call.1} parent=1 // loop_header_branch
      %30 = sbr.rel (%p28) target = $region8
    $region5: #{tpu_custom_call.1} parent=1 // loop_body
      %s32 = ssub.s32 %s27, 1
      %s33 = ssub.s32 %s27, 2
      %s34 = sadd.s32 %s27, 1
      %s35 = ssub.s32 %s27, %s34
      %p36 = scmp.eq.s32.totalorder %s35, 0
      %s38 = sadd.s32 %s37, 1
      %s39 = scalar_select %p36, %s37, %s38
      %p42 = pneg %p36
      %p43 = scmp.eq.s32.totalorder %s27, 1
      %p44 = por %p42, %p43
      %p45 = scmp.ne.s32.totalorder %s37, %s40
      %p46 = scmp.eq.s32.totalorder %s27, 0
      %p47 = por %p45, %p46
      %p48 = scmp.ne.s32.totalorder %s37, %s40
      %p49 = scmp.eq.s32.totalorder %s32, 1
      %p50 = por %p48, %p49
      %p51 = scmp.ne.s32.totalorder %s40, %s41
      %p52 = scmp.eq.s32.totalorder %s32, 0
      %p53 = por %p51, %p52
      %p54 = scmp.ne.s32.totalorder %s40, %s41
      %p55 = scmp.eq.s32.totalorder %s33, 1
      %p56 = por %p54, %p55
      %p58 = scmp.ne.s32.totalorder %s41, %s57
      %p59 = scmp.eq.s32.totalorder %s33, 0
      %p60 = por %p58, %p59
      %s62 = sadd.s32 %s61, 1
      %p65 = scmp.eq.s32.totalorder %s27, 1
      %p66 = scmp.ne.s32.totalorder %s61, %s63
      %p67 = scmp.eq.s32.totalorder %s27, 0
      %p68 = por %p66, %p67
      %p69 = scmp.ne.s32.totalorder %s61, %s63
      %p70 = scmp.eq.s32.totalorder %s32, 1
      %p71 = por %p69, %p70
      %p72 = scmp.ne.s32.totalorder %s63, %s64
      %p73 = scmp.eq.s32.totalorder %s32, 0
      %p74 = por %p72, %p73
      %p75 = scmp.ne.s32.totalorder %s63, %s64
      %p76 = scmp.eq.s32.totalorder %s33, 1
      %p77 = por %p75, %p76
      %p79 = scmp.ne.s32.totalorder %s64, %s78
      %p80 = scmp.eq.s32.totalorder %s33, 0
      %p81 = por %p79, %p80
      %s83 = sadd.s32 %s82, 1
      %p86 = scmp.eq.s32.totalorder %s27, 1
      %p87 = scmp.ne.s32.totalorder %s82, %s84
      %p88 = scmp.eq.s32.totalorder %s27, 0
      %p89 = por %p87, %p88
      %p90 = scmp.ne.s32.totalorder %s82, %s84
      %p91 = scmp.eq.s32.totalorder %s32, 1
      %p92 = por %p90, %p91
      %p93 = scmp.ne.s32.totalorder %s84, %s85
      %p94 = scmp.eq.s32.totalorder %s32, 0
      %p95 = por %p93, %p94
      %p96 = scmp.ne.s32.totalorder %s84, %s85
      %p97 = scmp.eq.s32.totalorder %s33, 1
      %p98 = por %p96, %p97
      %p100 = scmp.ne.s32.totalorder %s85, %s99
      %p101 = scmp.eq.s32.totalorder %s33, 0
      %p102 = por %p100, %p101
      %s104 = sadd.s32 %s103, 1
      %p107 = scmp.eq.s32.totalorder %s27, 1
      %p108 = scmp.ne.s32.totalorder %s103, %s105
      %p109 = scmp.eq.s32.totalorder %s27, 0
      %p110 = por %p108, %p109
      %p111 = scmp.ne.s32.totalorder %s103, %s105
      %p112 = scmp.eq.s32.totalorder %s32, 1
      %p113 = por %p111, %p112
      %p114 = scmp.ne.s32.totalorder %s105, %s106
      %p115 = scmp.eq.s32.totalorder %s32, 0
      %p116 = por %p114, %p115
      %p117 = scmp.ne.s32.totalorder %s105, %s106
      %p118 = scmp.eq.s32.totalorder %s33, 1
      %p119 = por %p117, %p118
      %p121 = scmp.ne.s32.totalorder %s106, %s120
      %p122 = scmp.eq.s32.totalorder %s33, 0
      %p123 = por %p121, %p122
      %s125 = sadd.s32 %s124, 1
      %p128 = scmp.eq.s32.totalorder %s27, 1
      %p129 = scmp.ne.s32.totalorder %s124, %s126
      %p130 = scmp.eq.s32.totalorder %s27, 0
      %p131 = por %p129, %p130
      %p132 = scmp.ne.s32.totalorder %s124, %s126
      %p133 = scmp.eq.s32.totalorder %s32, 1
      %p134 = por %p132, %p133
      %p135 = scmp.ne.s32.totalorder %s126, %s127
      %p136 = scmp.eq.s32.totalorder %s32, 0
      %p137 = por %p135, %p136
      %p138 = scmp.ne.s32.totalorder %s126, %s127
      %p139 = scmp.eq.s32.totalorder %s33, 1
      %p140 = por %p138, %p139
      %p142 = scmp.ne.s32.totalorder %s127, %s141
      %p143 = scmp.eq.s32.totalorder %s33, 0
      %p144 = por %p142, %p143
      %s146 = sadd.s32 %s145, 1
      %p149 = scmp.eq.s32.totalorder %s27, 1
      %p150 = scmp.ne.s32.totalorder %s145, %s147
      %p151 = scmp.eq.s32.totalorder %s27, 0
      %p152 = por %p150, %p151
      %p153 = scmp.ne.s32.totalorder %s145, %s147
      %p154 = scmp.eq.s32.totalorder %s32, 1
      %p155 = por %p153, %p154
      %p156 = scmp.ne.s32.totalorder %s147, %s148
      %p157 = scmp.eq.s32.totalorder %s32, 0
      %p158 = por %p156, %p157
      %p159 = scmp.ne.s32.totalorder %s147, %s148
      %p160 = scmp.eq.s32.totalorder %s33, 1
      %p161 = por %p159, %p160
      %p163 = scmp.ne.s32.totalorder %s148, %s162
      %p164 = scmp.eq.s32.totalorder %s33, 0
      %p165 = por %p163, %p164
      %s167 = sadd.s32 %s166, 1
      %p170 = scmp.eq.s32.totalorder %s27, 1
      %p171 = scmp.ne.s32.totalorder %s166, %s168
      %p172 = scmp.eq.s32.totalorder %s27, 0
      %p173 = por %p171, %p172
      %p174 = scmp.ne.s32.totalorder %s166, %s168
      %p175 = scmp.eq.s32.totalorder %s32, 1
      %p176 = por %p174, %p175
      %p177 = scmp.ne.s32.totalorder %s168, %s169
      %p178 = scmp.eq.s32.totalorder %s32, 0
      %p179 = por %p177, %p178
      %p180 = scmp.ne.s32.totalorder %s168, %s169
      %p181 = scmp.eq.s32.totalorder %s33, 1
      %p182 = por %p180, %p181
      %p184 = scmp.ne.s32.totalorder %s169, %s183
      %p185 = scmp.eq.s32.totalorder %s33, 0
      %p186 = por %p184, %p185
      %s188 = sadd.s32 %s187, 1
      %p191 = scmp.eq.s32.totalorder %s27, 1
      %p192 = scmp.ne.s32.totalorder %s187, %s189
      %p193 = scmp.eq.s32.totalorder %s27, 0
      %p194 = por %p192, %p193
      %p195 = scmp.ne.s32.totalorder %s187, %s189
      %p196 = scmp.eq.s32.totalorder %s32, 1
      %p197 = por %p195, %p196
      %p198 = scmp.ne.s32.totalorder %s189, %s190
      %p199 = scmp.eq.s32.totalorder %s32, 0
      %p200 = por %p198, %p199
      %p201 = scmp.ne.s32.totalorder %s189, %s190
      %p202 = scmp.eq.s32.totalorder %s33, 1
      %p203 = por %p201, %p202
      %p205 = scmp.ne.s32.totalorder %s190, %s204
      %p206 = scmp.eq.s32.totalorder %s33, 0
      %p207 = por %p205, %p206
      %s209 = sadd.s32 %s208, 1
      %p212 = scmp.eq.s32.totalorder %s27, 1
      %p213 = scmp.ne.s32.totalorder %s208, %s210
      %p214 = scmp.eq.s32.totalorder %s27, 0
      %p215 = por %p213, %p214
      %p216 = scmp.ne.s32.totalorder %s208, %s210
      %p217 = scmp.eq.s32.totalorder %s32, 1
      %p218 = por %p216, %p217
      %p219 = scmp.ne.s32.totalorder %s210, %s211
      %p220 = scmp.eq.s32.totalorder %s32, 0
      %p221 = por %p219, %p220
      %p222 = scmp.ne.s32.totalorder %s210, %s211
      %p223 = scmp.eq.s32.totalorder %s33, 1
      %p224 = por %p222, %p223
      %p226 = scmp.ne.s32.totalorder %s211, %s225
      %p227 = scmp.eq.s32.totalorder %s33, 0
      %p228 = por %p226, %p227
      %s230 = sadd.s32 %s229, 1
      %p233 = scmp.eq.s32.totalorder %s27, 1
      %p234 = scmp.ne.s32.totalorder %s229, %s231
      %p235 = scmp.eq.s32.totalorder %s27, 0
      %p236 = por %p234, %p235
      %p237 = scmp.ne.s32.totalorder %s229, %s231
      %p238 = scmp.eq.s32.totalorder %s32, 1
      %p239 = por %p237, %p238
      %p240 = scmp.ne.s32.totalorder %s231, %s232
      %p241 = scmp.eq.s32.totalorder %s32, 0
      %p242 = por %p240, %p241
      %p243 = scmp.ne.s32.totalorder %s231, %s232
      %p244 = scmp.eq.s32.totalorder %s33, 1
      %p245 = por %p243, %p244
      %p247 = scmp.ne.s32.totalorder %s232, %s246
      %p248 = scmp.eq.s32.totalorder %s33, 0
      %p249 = por %p247, %p248
      %s251 = sadd.s32 %s250, 1
      %p254 = scmp.eq.s32.totalorder %s27, 1
      %p255 = scmp.ne.s32.totalorder %s250, %s252
      %p256 = scmp.eq.s32.totalorder %s27, 0
      %p257 = por %p255, %p256
      %p258 = scmp.ne.s32.totalorder %s250, %s252
      %p259 = scmp.eq.s32.totalorder %s32, 1
      %p260 = por %p258, %p259
      %p261 = scmp.ne.s32.totalorder %s252, %s253
      %p262 = scmp.eq.s32.totalorder %s32, 0
      %p263 = por %p261, %p262
      %p264 = scmp.ne.s32.totalorder %s252, %s253
      %p265 = scmp.eq.s32.totalorder %s33, 1
      %p266 = por %p264, %p265
      %p268 = scmp.ne.s32.totalorder %s253, %s267
      %p269 = scmp.eq.s32.totalorder %s33, 0
      %p270 = por %p268, %p269
      %s272 = sadd.s32 %s271, 1
      %p275 = scmp.eq.s32.totalorder %s27, 1
      %p276 = scmp.ne.s32.totalorder %s271, %s273
      %p277 = scmp.eq.s32.totalorder %s27, 0
      %p278 = por %p276, %p277
      %p279 = scmp.ne.s32.totalorder %s271, %s273
      %p280 = scmp.eq.s32.totalorder %s32, 1
      %p281 = por %p279, %p280
      %p282 = scmp.ne.s32.totalorder %s273, %s274
      %p283 = scmp.eq.s32.totalorder %s32, 0
      %p284 = por %p282, %p283
      %p285 = scmp.ne.s32.totalorder %s273, %s274
      %p286 = scmp.eq.s32.totalorder %s33, 1
      %p287 = por %p285, %p286
      %p289 = scmp.ne.s32.totalorder %s274, %s288
      %p290 = scmp.eq.s32.totalorder %s33, 0
      %p291 = por %p289, %p290
      %s292 = ssub.s32 %s27, %s34
      %p293 = scmp.eq.s32.totalorder %s292, 0
      %s295 = sadd.s32 %s294, 1
      %s296 = scalar_select %p293, %s294, %s295
      %p299 = pneg %p293
      %p300 = scmp.eq.s32.totalorder %s27, 1
      %p301 = por %p299, %p300
      %p302 = scmp.ne.s32.totalorder %s294, %s297
      %p303 = scmp.eq.s32.totalorder %s27, 0
      %p304 = por %p302, %p303
      %p305 = scmp.ne.s32.totalorder %s294, %s297
      %p306 = scmp.eq.s32.totalorder %s32, 1
      %p307 = por %p305, %p306
      %p308 = scmp.ne.s32.totalorder %s297, %s298
      %p309 = scmp.eq.s32.totalorder %s32, 0
      %p310 = por %p308, %p309
      %p311 = scmp.ne.s32.totalorder %s297, %s298
      %p312 = scmp.eq.s32.totalorder %s33, 1
      %p313 = por %p311, %p312
      %p315 = scmp.ne.s32.totalorder %s298, %s314
      %p316 = scmp.eq.s32.totalorder %s33, 0
      %p317 = por %p315, %p316
      %s318 = ssub.s32 %s27, %s34
      %p319 = scmp.eq.s32.totalorder %s318, 0
      %s321 = sadd.s32 %s320, 1
      %s322 = scalar_select %p319, %s320, %s321
      %p325 = pneg %p319
      %p326 = scmp.eq.s32.totalorder %s27, 1
      %p327 = por %p325, %p326
      %p328 = scmp.ne.s32.totalorder %s320, %s323
      %p329 = scmp.eq.s32.totalorder %s27, 0
      %p330 = por %p328, %p329
      %p331 = scmp.ne.s32.totalorder %s320, %s323
      %p332 = scmp.eq.s32.totalorder %s32, 1
      %p333 = por %p331, %p332
      %p334 = scmp.ne.s32.totalorder %s323, %s324
      %p335 = scmp.eq.s32.totalorder %s32, 0
      %p336 = por %p334, %p335
      %p337 = scmp.ne.s32.totalorder %s323, %s324
      %p338 = scmp.eq.s32.totalorder %s33, 1
      %p339 = por %p337, %p338
      %p341 = scmp.ne.s32.totalorder %s324, %s340
      %p342 = scmp.eq.s32.totalorder %s33, 0
      %p343 = por %p341, %p342
      %p344 = scmp.le.s32.totalorder 1, %s27
      %p345 = scmp.lt.s32.totalorder %s27, 3
      %p346 = pnand %p344, %p345
      %p347 = pneg %p346
      // Predicated region
      $region9: #{tpu_custom_call.1} parent=5 // pred_check
        _
      $region10: #{tpu_custom_call.1} parent=5 // pred_check_branch
        %349 = sbr.rel (%p346) target = $region12
      $region11: #{tpu_custom_call.1} parent=5 // pred_region
        %s350 = ssub.s32 %s27, 1
        // Predicated region
        $region13: #{tpu_custom_call.1} parent=11 // pred_check
          %p351 = pneg %p74
        $region14: #{tpu_custom_call.1} parent=11 // pred_check_branch
          %353 = sbr.rel (%p351) target = $region16
        $region15: #{tpu_custom_call.1} parent=11 // pred_region
          _
        $region16: #{tpu_custom_call.1} parent=11 // pred_fallthru
          _
        // Predicated region
        $region17: #{tpu_custom_call.1} parent=11 // pred_check
          %p354 = pneg %p95
        $region18: #{tpu_custom_call.1} parent=11 // pred_check_branch
          %356 = sbr.rel (%p354) target = $region20
        $region19: #{tpu_custom_call.1} parent=11 // pred_region
          _
        $region20: #{tpu_custom_call.1} parent=11 // pred_fallthru
          _
        // Predicated region
        $region21: #{tpu_custom_call.1} parent=11 // pred_check
          %p357 = pneg %p116
        $region22: #{tpu_custom_call.1} parent=11 // pred_check_branch
          %359 = sbr.rel (%p357) target = $region24
        $region23: #{tpu_custom_call.1} parent=11 // pred_region
          _
        $region24: #{tpu_custom_call.1} parent=11 // pred_fallthru
          _
        // Predicated region
        $region25: #{tpu_custom_call.1} parent=11 // pred_check
          %p360 = pneg %p137
        $region26: #{tpu_custom_call.1} parent=11 // pred_check_branch
          %362 = sbr.rel (%p360) target = $region28
        $region27: #{tpu_custom_call.1} parent=11 // pred_region
          _
        $region28: #{tpu_custom_call.1} parent=11 // pred_fallthru
          _
        // Predicated region
        $region29: #{tpu_custom_call.1} parent=11 // pred_check
          %p363 = pneg %p158
        $region30: #{tpu_custom_call.1} parent=11 // pred_check_branch
          %365 = sbr.rel (%p363) target = $region32
        $region31: #{tpu_custom_call.1} parent=11 // pred_region
          _
        $region32: #{tpu_custom_call.1} parent=11 // pred_fallthru
          _
        // Predicated region
        $region33: #{tpu_custom_call.1} parent=11 // pred_check
          %p366 = pneg %p179
        $region34: #{tpu_custom_call.1} parent=11 // pred_check_branch
          %368 = sbr.rel (%p366) target = $region36
        $region35: #{tpu_custom_call.1} parent=11 // pred_region
          _
        $region36: #{tpu_custom_call.1} parent=11 // pred_fallthru
          _
        // Predicated region
        $region37: #{tpu_custom_call.1} parent=11 // pred_check
          %p369 = pneg %p200
        $region38: #{tpu_custom_call.1} parent=11 // pred_check_branch
          %371 = sbr.rel (%p369) target = $region40
        $region39: #{tpu_custom_call.1} parent=11 // pred_region
          _
        $region40: #{tpu_custom_call.1} parent=11 // pred_fallthru
          _
        // Predicated region
        $region41: #{tpu_custom_call.1} parent=11 // pred_check
          %p372 = pneg %p221
        $region42: #{tpu_custom_call.1} parent=11 // pred_check_branch
          %374 = sbr.rel (%p372) target = $region44
        $region43: #{tpu_custom_call.1} parent=11 // pred_region
          _
        $region44: #{tpu_custom_call.1} parent=11 // pred_fallthru
          _
        // Predicated region
        $region45: #{tpu_custom_call.1} parent=11 // pred_check
          %p375 = pneg %p242
        $region46: #{tpu_custom_call.1} parent=11 // pred_check_branch
          %377 = sbr.rel (%p375) target = $region48
        $region47: #{tpu_custom_call.1} parent=11 // pred_region
          _
        $region48: #{tpu_custom_call.1} parent=11 // pred_fallthru
          _
        // Predicated region
        $region49: #{tpu_custom_call.1} parent=11 // pred_check
          %p378 = pneg %p263
        $region50: #{tpu_custom_call.1} parent=11 // pred_check_branch
          %380 = sbr.rel (%p378) target = $region52
        $region51: #{tpu_custom_call.1} parent=11 // pred_region
          _
        $region52: #{tpu_custom_call.1} parent=11 // pred_fallthru
          _
        // Predicated region
        $region53: #{tpu_custom_call.1} parent=11 // pred_check
          %p381 = pneg %p284
        $region54: #{tpu_custom_call.1} parent=11 // pred_check_branch
          %383 = sbr.rel (%p381) target = $region56
        $region55: #{tpu_custom_call.1} parent=11 // pred_region
          _
        $region56: #{tpu_custom_call.1} parent=11 // pred_fallthru
          _
      $region12: #{tpu_custom_call.1} parent=5 // pred_fallthru
        _
      %p384 = scmp.lt.s32.totalorder %s27, 2
      // Predicated region
      $region57: #{tpu_custom_call.1} parent=5 // pred_check
        %p385 = pneg %p384
      $region58: #{tpu_custom_call.1} parent=5 // pred_check_branch
        %387 = sbr.rel (%p385) target = $region60
      $region59: #{tpu_custom_call.1} parent=5 // pred_region
        // Predicated region
        $region61: #{tpu_custom_call.1} parent=59 // pred_check
          %p388 = pneg %p47
        $region62: #{tpu_custom_call.1} parent=59 // pred_check_branch
          %390 = sbr.rel (%p388) target = $region64
        $region63: #{tpu_custom_call.1} parent=59 // pred_region
          %p391 = scmp.lt.s32.totalorder %s27, 1
          %s392 = scalar_select %p391, %s27, 1
          %s393 = smul.addr %s392, 4
          %s394 = smul.addr %s393, 4
          %s395 = scalar_lea.vmem %s0, %s394
        $region64: #{tpu_custom_call.1} parent=59 // pred_fallthru
          _
      $region60: #{tpu_custom_call.1} parent=5 // pred_fallthru
        _
      %p396 = scmp.le.s32.totalorder 1, %s27
      %p397 = scmp.lt.s32.totalorder %s27, 3
      %p398 = pnand %p396, %p397
      %p399 = pneg %p398
      // Predicated region
      $region65: #{tpu_custom_call.1} parent=5 // pred_check
        _
      $region66: #{tpu_custom_call.1} parent=5 // pred_check_branch
        %401 = sbr.rel (%p398) target = $region68
      $region67: #{tpu_custom_call.1} parent=5 // pred_region
        %s402 = ssub.s32 %s27, 1
        %p403 = scmp.lt.s32.totalorder %s32, 1
        %s404 = scalar_select %p403, %s32, 1
        %s405 = smul.addr %s404, 4
        %s406 = smul.addr %s405, 4
        %s407 = scalar_lea.vmem %s0, %s406
        %p408 = pneg %p53
        %p409 = pneg %p50
        %p410 = pneg %p74
        %p411 = pneg %p71
        %p412 = pneg %p95
        %p413 = pneg %p92
        %p414 = pneg %p116
        %p415 = pneg %p113
        %p416 = pneg %p137
        %p417 = pneg %p134
        %p418 = pneg %p158
        %p419 = pneg %p155
        %p420 = pneg %p179
        %p421 = pneg %p176
        %p422 = pneg %p200
        %p423 = pneg %p197
        %p424 = pneg %p221
        %p425 = pneg %p218
        %p426 = pneg %p242
        %p427 = pneg %p239
        %p428 = pneg %p263
        %p429 = pneg %p260
        %p430 = pneg %p284
        %p431 = pneg %p281
        %p432 = pneg %p310
        %p433 = pneg %p307
        %s434 = sand.u32 %s297, 1
        %s435 = scalar_lea.sflag [#allocation5], %s434
        %s436 = sand.u32 %s297, 1
        %s437 = smul.addr %s436, 32
        %s438 = scalar_lea.vmem [#allocation4], %s437
        %p439 = pneg %p336
        %p440 = pneg %p333
        %s441 = sand.u32 %s323, 1
        %s442 = scalar_lea.sflag [#allocation7], %s441
        %s443 = sand.u32 %s323, 1
        %s444 = smul.addr %s443, 16
        %s445 = scalar_lea.vmem [#allocation6], %s444
        %p446 = scmp.lt.s32.totalorder %s32, 1
        %s447 = scalar_select %p446, %s32, 1
        %s448 = smul.addr %s447, 4
        %s449 = smul.addr %s448, 4
        %s450 = scalar_lea.vmem %s0, %s449
        %s452 = sld [smem:[#allocation3]]
        %v453 = vlaneseq
        %v454 = vand.u32 %v453, 127
        %vm455 = vcmp.lt.s32.totalorder %v454, 50
        %v456 = vsel %vm455, 1, 0
        %v457 = vcvt.s32.f32 %v456
        %v458 = vld [vmem:[%s1] sm:$0xf]
        %v459 = vld [vmem:[%s1 + $0x4] sm:$0xf]
        %v460 = vld [vmem:[%s1 + $0x8] sm:$0xf]
        %v461 = vld [vmem:[%s1 + $0xc] sm:$0xf]
        %v462 = vld [vmem:[%s450] sm:$0xf]
        %v463 = vld [vmem:[%s450 + $0x4] sm:$0xf]
        %v464 = vld [vmem:[%s450 + $0x8] sm:$0xf]
        %v465 = vld [vmem:[%s450 + $0xc] sm:$0xf]
        %v466 = vld [vmem:[%s2] sm:$0xff]
        %v467 = vld [vmem:[%s2 + $0x8] sm:$0xff]
        %v468 = vld [vmem:[%s2 + $0x10] sm:$0xff]
        %v469 = vld [vmem:[%s2 + $0x18] sm:$0xff]
        %471 = vset.pattern.permute.xlu0 0
        %472 = vperm.xlu0 %471, %v466
        %v473 = vpop.permute.xlu0 %472
        %476 = vset.pattern.permute.xlu0 0
        %477 = vperm.xlu0 %476, %v467
        %v478 = vpop.permute.xlu0 %477
        %481 = vset.pattern.permute.xlu0 0
        %482 = vperm.xlu0 %481, %v468
        %v483 = vpop.permute.xlu0 %482
        %486 = vset.pattern.permute.xlu0 0
        %487 = vperm.xlu0 %486, %v469
        %v488 = vpop.permute.xlu0 %487
        %v494 = vunpack.c.l.b16 %v458
        %v495 = vunpack.c.l.b16 %v459
        %v496 = vunpack.c.l.b16 %v460
        %v497 = vunpack.c.l.b16 %v461
        %v498 = vpack.c.b16 %v495, %v494
        %v499 = vpack.c.b16 %v497, %v496
        %v504 = vunpack.c.l.b16 %v462
        %v505 = vunpack.c.l.b16 %v463
        %v506 = vunpack.c.l.b16 %v464
        %v507 = vunpack.c.l.b16 %v465
        %v508 = vpack.c.b16 %v505, %v504
        %v509 = vpack.c.b16 %v507, %v506
        %vm512 = vcmask 261120
        %v514 = vsel %vm512, %v498, 0
        %v517 = vsel %vm512, %v499, 0
        %519 = vmatprep.subr.bf16.mxu0 0
        %520 = vmatpush1.bf16.msra.mxu0 %v508
        %521 = vmatprep.subr.bf16.mxu0 0
        %522 = vmatpush1.bf16.msra.mxu0 %v509
        %523 = vmatprep.subr.bf16.mxu0 0
        %524 = vmatpush1.bf16.msra.mxu0 0
        %525 = vmatprep.subr.bf16.mxu0 0
        %526 = vmatpush1.bf16.msra.mxu0 0
        %527 = vmatprep.subr.bf16.mxu0 0
        %528 = vmatpush1.bf16.msra.mxu0 0
        %529 = vmatprep.subr.bf16.mxu0 0
        %530 = vmatpush1.bf16.msra.mxu0 0
        %531 = vmatprep.subr.bf16.mxu0 0
        %532 = vmatpush1.bf16.msra.mxu0 0
        %533 = vmatprep.subr.bf16.mxu0 0
        %534 = vmatpush1.bf16.msra.mxu0 0
        %535 = vmatprep.subr.bf16.mxu0 0
        %536 = vmatpush1.bf16.msra.mxu0 0
        %537 = vmatprep.subr.bf16.mxu0 0
        %538 = vmatpush1.bf16.msra.mxu0 0
        %539 = vmatprep.subr.bf16.mxu0 0
        %540 = vmatpush1.bf16.msra.mxu0 0
        %541 = vmatprep.subr.bf16.mxu0 0
        %542 = vmatpush1.bf16.msra.mxu0 0
        %543 = vmatprep.subr.bf16.mxu0 0
        %544 = vmatpush1.bf16.msra.mxu0 0
        %545 = vmatprep.subr.bf16.mxu0 0
        %546 = vmatpush1.bf16.msra.mxu0 0
        %547 = vmatprep.subr.bf16.mxu0 0
        %548 = vmatpush1.bf16.msra.mxu0 0
        %549 = vmatprep.subr.bf16.mxu0 0
        %550 = vmatpush1.bf16.msra.mxu0 0
        %551 = vmatprep.mubr.bf16.mxu0 0
        %552 = vmatmul.mubr.bf16.gmra.mrb[0].mxu0 %v514
        %v553 = vpop.f32.mrb[0].mxu0
        %v554 = vadd.f32 %v473, %v553
        %v555 = vpop.f32.mrb[0].mxu0
        %v556 = vpop.f32.mrb[0].mxu0
        %v557 = vadd.f32 %v478, %v556
        %v558 = vpop.f32.mrb[0].mxu0
        %559 = vmatprep.mubr.bf16.mxu0 0
        %560 = vmatmul.mubr.bf16.gmra.mrb[0].mxu0 %v517
        %v561 = vpop.f32.mrb[0].mxu0
        %v562 = vadd.f32 %v483, %v561
        %v563 = vpop.f32.mrb[0].mxu0
        %v564 = vpop.f32.mrb[0].mxu0
        %v565 = vadd.f32 %v488, %v564
        %v566 = vpop.f32.mrb[0].mxu0
        %567 = vdwg.mxu0
        %v568 = vadd.f32 %v554, %v557
        %v569 = vadd.f32 %v568, %v562
        %v570 = vadd.f32 %v569, %v565
        %571 = vadd.xlane.f32.xlu0 %v570
        %v572 = vpop.xlane.xlu0 %571
        %v573 = vrot.slane %v572, 4
        %v574 = vadd.f32 %v572, %v573
        %v575 = vrot.slane %v574, 2
        %v576 = vadd.f32 %v574, %v575
        %v577 = vrot.slane %v576, 1
        %v578 = vadd.f32 %v576, %v577
        %s579 = vtos %v578
        %v580 = vmul.f32 %v554, %v554
        %v581 = vmul.f32 %v557, %v557
        %v582 = vmul.f32 %v562, %v562
        %v583 = vmul.f32 %v565, %v565
        %v584 = vadd.f32 %v580, %v581
        %v585 = vadd.f32 %v584, %v582
        %v586 = vadd.f32 %v585, %v583
        %587 = vadd.xlane.f32.xlu0 %v586
        %v588 = vpop.xlane.xlu0 %587
        %v589 = vrot.slane %v588, 4
        %v590 = vadd.f32 %v588, %v589
        %v591 = vrot.slane %v590, 2
        %v592 = vadd.f32 %v590, %v591
        %v593 = vrot.slane %v592, 1
        %v594 = vadd.f32 %v592, %v593
        %s595 = vtos %v594
        %vm596 = vcmask 7168
        %v597 = vsel %vm596, %v466, 0.0
        %v598 = vsel %vm596, %v467, 0.0
        %v599 = vadd.f32 %v597, %v598
        %v600 = vsel %vm596, %v468, 0.0
        %v601 = vadd.f32 %v599, %v600
        %v602 = vsel %vm596, %v469, 0.0
        %v603 = vadd.f32 %v601, %v602
        %604 = vadd.xlane.f32.xlu0 %v603
        %v605 = vpop.xlane.xlu0 %604
        %v606 = vrot.slane %v605, 4
        %v607 = vadd.f32 %v605, %v606
        %v608 = vrot.slane %v607, 2
        %v609 = vadd.f32 %v607, %v608
        %v610 = vrot.slane %v609, 1
        %v611 = vadd.f32 %v609, %v610
        %s612 = vtos %v611
        %s613 = smul.f32 %s612, 78.0
        %s614 = ssub.f32 %s579, %s613
        %v615 = vmul.f32 %v466, %v466
        %v616 = vmul.f32 %v467, %v467
        %v617 = vmul.f32 %v468, %v468
        %v618 = vmul.f32 %v469, %v469
        %v619 = vsel %vm596, %v615, 0.0
        %v620 = vsel %vm596, %v616, 0.0
        %v621 = vadd.f32 %v619, %v620
        %v622 = vsel %vm596, %v617, 0.0
        %v623 = vadd.f32 %v621, %v622
        %v624 = vsel %vm596, %v618, 0.0
        %v625 = vadd.f32 %v623, %v624
        %626 = vadd.xlane.f32.xlu0 %v625
        %v627 = vpop.xlane.xlu0 %626
        %v628 = vrot.slane %v627, 4
        %v629 = vadd.f32 %v627, %v628
        %v630 = vrot.slane %v629, 2
        %v631 = vadd.f32 %v629, %v630
        %v632 = vrot.slane %v631, 1
        %v633 = vadd.f32 %v631, %v632
        %s634 = vtos %v633
        %s635 = smul.f32 %s634, 78.0
        %s636 = ssub.f32 %s595, %s635
        %s637 = smul.f32 %s614, 0.0007142857
        %s638 = smul.f32 %s636, 0.0007142857
        %s639 = smul.f32 %s637, %s637
        %s640 = ssub.f32 %s638, %s639
        %s641 = smax.f32 %s640, 0.0
        %s642 = sadd.f32 %s641, 1e-08
        %v643 = vstv %s642
        %v644 = vrsqrt.pop %v643
        %s645 = vtos %v644
        %v646 = vld [vmem:[%s3] sm:$0xff]
        %v647 = vld [vmem:[%s3 + $0x8] sm:$0xff]
        %v648 = vld [vmem:[%s3 + $0x10] sm:$0xff]
        %v649 = vld [vmem:[%s3 + $0x18] sm:$0xff]
        %v650 = vstv %s637
        %v651 = vsub.f32 %v554, %v650
        %v652 = vsub.f32 %v557, %v650
        %v653 = vsub.f32 %v562, %v650
        %v654 = vsub.f32 %v565, %v650
        %v655 = vstv %s645
        %v656 = vmul.f32 %v651, %v655
        %v657 = vmul.f32 %v652, %v655
        %v658 = vmul.f32 %v653, %v655
        %v659 = vmul.f32 %v654, %v655
        %661 = vset.pattern.permute.xlu0 0
        %662 = vperm.xlu0 %661, %v646
        %v663 = vpop.permute.xlu0 %662
        %666 = vset.pattern.permute.xlu0 0
        %667 = vperm.xlu0 %666, %v647
        %v668 = vpop.permute.xlu0 %667
        %671 = vset.pattern.permute.xlu0 0
        %672 = vperm.xlu0 %671, %v648
        %v673 = vpop.permute.xlu0 %672
        %676 = vset.pattern.permute.xlu0 0
        %677 = vperm.xlu0 %676, %v649
        %v678 = vpop.permute.xlu0 %677
        %v680 = vmul.f32 %v663, %v656
        %v681 = vmul.f32 %v668, %v657
        %v682 = vmul.f32 %v673, %v658
        %v683 = vmul.f32 %v678, %v659
        %v684 = vld [vmem:[%s4] sm:$0xff]
        %v685 = vld [vmem:[%s4 + $0x8] sm:$0xff]
        %v686 = vld [vmem:[%s4 + $0x10] sm:$0xff]
        %v687 = vld [vmem:[%s4 + $0x18] sm:$0xff]
        %689 = vset.pattern.permute.xlu0 0
        %690 = vperm.xlu0 %689, %v684
        %v691 = vpop.permute.xlu0 %690
        %694 = vset.pattern.permute.xlu0 0
        %695 = vperm.xlu0 %694, %v685
        %v696 = vpop.permute.xlu0 %695
        %699 = vset.pattern.permute.xlu0 0
        %700 = vperm.xlu0 %699, %v686
        %v701 = vpop.permute.xlu0 %700
        %704 = vset.pattern.permute.xlu0 0
        %705 = vperm.xlu0 %704, %v687
        %v706 = vpop.permute.xlu0 %705
        %v708 = vadd.f32 %v680, %v691
        %v709 = vadd.f32 %v681, %v696
        %v710 = vadd.f32 %v682, %v701
        %v711 = vadd.f32 %v683, %v706
        %vm712 = vcmp.gt.f32.partialorder %v708, 0.0
        %vm713 = vcmp.gt.f32.partialorder %v709, 0.0
        %vm714 = vcmp.gt.f32.partialorder %v710, 0.0
        %vm715 = vcmp.gt.f32.partialorder %v711, 0.0
        %v716 = vstv %s452
        %v717 = vmul.f32 %v716, %v708
        %v718 = vmul.f32 %v716, %v709
        %v719 = vmul.f32 %v716, %v710
        %v720 = vmul.f32 %v716, %v711
        %v721 = vsel %vm712, %v708, %v717
        %v722 = vsel %vm713, %v709, %v718
        %v723 = vsel %vm714, %v710, %v719
        %v724 = vsel %vm715, %v711, %v720
        %vm725 = vcmask 1048544
        %726 = vst.msk [vmem:[#allocation2] sm:$0xff] %vm725, 0.0
        %727 = vst.msk [vmem:[#allocation2 + $0x18] sm:$0xff] %vm725, 0.0
        %728 = vst.msk [vmem:[#allocation2 + $0x30] sm:$0xff] %vm725, 0.0
        %729 = vst.msk [vmem:[#allocation2 + $0x48] sm:$0xff] %vm725, 0.0
        %vm730 = vcmask 31744
        %731 = vst.msk [vmem:[#allocation2 + $0x10] sm:$0xff] %vm730, 0.0
        %732 = vst.msk [vmem:[#allocation2 + $0x28] sm:$0xff] %vm730, 0.0
        %733 = vst.msk [vmem:[#allocation2 + $0x40] sm:$0xff] %vm730, 0.0
        %734 = vst.msk [vmem:[#allocation2 + $0x58] sm:$0xff] %vm730, 0.0
        %v735 = vmul.f32 %v721, %v457
        %v736 = vmul.f32 %v722, %v457
        %v737 = vmul.f32 %v723, %v457
        %v738 = vmul.f32 %v724, %v457
        %739 = vst [vmem:[#allocation2 + $0x8] sm:$0xff] %v735
        %740 = vst [vmem:[#allocation2 + $0x20] sm:$0xff] %v736
        %741 = vst [vmem:[#allocation2 + $0x38] sm:$0xff] %v737
        %742 = vst [vmem:[#allocation2 + $0x50] sm:$0xff] %v738
        %v743 = vld [vmem:[%s5] sm:$0xff]
        %v744 = vld [vmem:[%s5 + $0x8] sm:$0xff]
        %v745 = vld [vmem:[%s5 + $0x10] sm:$0xff]
        %v746 = vld [vmem:[%s5 + $0x18] sm:$0xff]
        %v747 = vld [vmem:[#allocation2] sm:$0xff]
        %v748 = vld [vmem:[#allocation2 + $0x8] sm:$0xff]
        %v749 = vld [vmem:[#allocation2 + $0x18] sm:$0xff]
        %v750 = vld [vmem:[#allocation2 + $0x20] sm:$0xff]
        %v751 = vld [vmem:[#allocation2 + $0x30] sm:$0xff]
        %v752 = vld [vmem:[#allocation2 + $0x38] sm:$0xff]
        %v753 = vld [vmem:[#allocation2 + $0x48] sm:$0xff]
        %v754 = vld [vmem:[#allocation2 + $0x50] sm:$0xff]
        %756 = vset.pattern.permute.xlu0 0
        %757 = vperm.xlu0 %756, %v743
        %v758 = vpop.permute.xlu0 %757
        %761 = vset.pattern.permute.xlu0 0
        %762 = vperm.xlu0 %761, %v744
        %v763 = vpop.permute.xlu0 %762
        %766 = vset.pattern.permute.xlu0 0
        %767 = vperm.xlu0 %766, %v745
        %v768 = vpop.permute.xlu0 %767
        %771 = vset.pattern.permute.xlu0 0
        %772 = vperm.xlu0 %771, %v746
        %v773 = vpop.permute.xlu0 %772
        %v775 = vmul.f32 %v758, %v747
        %v776 = vmul.f32 %v758, %v748
        %v777 = vmul.f32 %v763, %v749
        %v778 = vmul.f32 %v763, %v750
        %v779 = vmul.f32 %v768, %v751
        %v780 = vmul.f32 %v768, %v752
        %v781 = vmul.f32 %v773, %v753
        %v782 = vmul.f32 %v773, %v754
        %783 = vset.pattern.permute.xlu0 1
        %784 = vperm.xlu0 %783, %v743
        %v785 = vpop.permute.xlu0 %784
        %787 = vset.pattern.permute.xlu0 1
        %788 = vperm.xlu0 %787, %v744
        %v789 = vpop.permute.xlu0 %788
        %791 = vset.pattern.permute.xlu0 1
        %792 = vperm.xlu0 %791, %v745
        %v793 = vpop.permute.xlu0 %792
        %795 = vset.pattern.permute.xlu0 1
        %796 = vperm.xlu0 %795, %v746
        %v797 = vpop.permute.xlu0 %796
        %v799 = vmul.f32 %v785, %v748
        %v800 = vmul.f32 %v789, %v750
        %v801 = vmul.f32 %v793, %v752
        %v802 = vmul.f32 %v797, %v754
        %807 = vrot.lane.b32.xlu0 %v799, 124
        %v808 = vpop.permute.xlu0 %807
        %809 = vrot.lane.b32.xlu0 %v800, 124
        %v810 = vpop.permute.xlu0 %809
        %811 = vrot.lane.b32.xlu0 %v801, 124
        %v812 = vpop.permute.xlu0 %811
        %813 = vrot.lane.b32.xlu0 %v802, 124
        %v814 = vpop.permute.xlu0 %813
        %v819 = vadd.f32 %v775, %v808
        %v820 = vadd.f32 %v776, %v808
        %v821 = vadd.f32 %v777, %v810
        %v822 = vadd.f32 %v778, %v810
        %v823 = vadd.f32 %v779, %v812
        %v824 = vadd.f32 %v780, %v812
        %v825 = vadd.f32 %v781, %v814
        %v826 = vadd.f32 %v782, %v814
        %v827 = vld [vmem:[#allocation2 + $0x8] sm:$0xff]
        %v828 = vld [vmem:[#allocation2 + $0x10] sm:$0xff]
        %v829 = vld [vmem:[#allocation2 + $0x20] sm:$0xff]
        %v830 = vld [vmem:[#allocation2 + $0x28] sm:$0xff]
        %v831 = vld [vmem:[#allocation2 + $0x38] sm:$0xff]
        %v832 = vld [vmem:[#allocation2 + $0x40] sm:$0xff]
        %v833 = vld [vmem:[#allocation2 + $0x50] sm:$0xff]
        %v834 = vld [vmem:[#allocation2 + $0x58] sm:$0xff]
        %835 = vset.pattern.permute.xlu0 2
        %836 = vperm.xlu0 %835, %v743
        %v837 = vpop.permute.xlu0 %836
        %839 = vset.pattern.permute.xlu0 2
        %840 = vperm.xlu0 %839, %v744
        %v841 = vpop.permute.xlu0 %840
        %843 = vset.pattern.permute.xlu0 2
        %844 = vperm.xlu0 %843, %v745
        %v845 = vpop.permute.xlu0 %844
        %847 = vset.pattern.permute.xlu0 2
        %848 = vperm.xlu0 %847, %v746
        %v849 = vpop.permute.xlu0 %848
        %v851 = vmul.f32 %v837, %v827
        %v852 = vmul.f32 %v837, %v828
        %v853 = vmul.f32 %v841, %v829
        %v854 = vmul.f32 %v841, %v830
        %v855 = vmul.f32 %v845, %v831
        %v856 = vmul.f32 %v845, %v832
        %v857 = vmul.f32 %v849, %v833
        %v858 = vmul.f32 %v849, %v834
        %867 = vrot.lane.b32.xlu0 %v851, 120
        %v868 = vpop.permute.xlu0 %867
        %869 = vrot.lane.b32.xlu0 %v852, 120
        %v870 = vpop.permute.xlu0 %869
        %871 = vrot.lane.b32.xlu0 %v853, 120
        %v872 = vpop.permute.xlu0 %871
        %873 = vrot.lane.b32.xlu0 %v854, 120
        %v874 = vpop.permute.xlu0 %873
        %875 = vrot.lane.b32.xlu0 %v855, 120
        %v876 = vpop.permute.xlu0 %875
        %877 = vrot.lane.b32.xlu0 %v856, 120
        %v878 = vpop.permute.xlu0 %877
        %879 = vrot.lane.b32.xlu0 %v857, 120
        %v880 = vpop.permute.xlu0 %879
        %881 = vrot.lane.b32.xlu0 %v858, 120
        %v882 = vpop.permute.xlu0 %881
        %vm883 = vcmask 982016
        %v884 = vsel %vm883, %v868, %v870
        %v885 = vsel %vm883, %v872, %v874
        %v886 = vsel %vm883, %v876, %v878
        %v887 = vsel %vm883, %v880, %v882
        %v896 = vadd.f32 %v819, %v868
        %v897 = vadd.f32 %v820, %v884
        %v898 = vadd.f32 %v821, %v872
        %v899 = vadd.f32 %v822, %v885
        %v900 = vadd.f32 %v823, %v876
        %v901 = vadd.f32 %v824, %v886
        %v902 = vadd.f32 %v825, %v880
        %v903 = vadd.f32 %v826, %v887
        %v904 = vld [vmem:[%s6] sm:$0xff]
        %v905 = vld [vmem:[%s6 + $0x8] sm:$0xff]
        %v906 = vld [vmem:[%s6 + $0x10] sm:$0xff]
        %v907 = vld [vmem:[%s6 + $0x18] sm:$0xff]
        %909 = vset.pattern.permute.xlu0 0
        %910 = vperm.xlu0 %909, %v904
        %v911 = vpop.permute.xlu0 %910
        %914 = vset.pattern.permute.xlu0 0
        %915 = vperm.xlu0 %914, %v905
        %v916 = vpop.permute.xlu0 %915
        %919 = vset.pattern.permute.xlu0 0
        %920 = vperm.xlu0 %919, %v906
        %v921 = vpop.permute.xlu0 %920
        %924 = vset.pattern.permute.xlu0 0
        %925 = vperm.xlu0 %924, %v907
        %v926 = vpop.permute.xlu0 %925
        %v928 = vadd.f32 %v896, %v911
        %v929 = vadd.f32 %v897, %v911
        %v930 = vadd.f32 %v898, %v916
        %v931 = vadd.f32 %v899, %v916
        %v932 = vadd.f32 %v900, %v921
        %v933 = vadd.f32 %v901, %v921
        %v934 = vadd.f32 %v902, %v926
        %v935 = vadd.f32 %v903, %v926
        %937 = vrot.lane.b32.xlu0 %v457, 124
        %v938 = vpop.permute.xlu0 %937
        %v940 = vmul.f32 %v928, %v938
        %v941 = vmul.f32 %v929, %v938
        %v942 = vmul.f32 %v930, %v938
        %v943 = vmul.f32 %v931, %v938
        %v944 = vmul.f32 %v932, %v938
        %v945 = vmul.f32 %v933, %v938
        %v946 = vmul.f32 %v934, %v938
        %v947 = vmul.f32 %v935, %v938
        %956 = vrot.lane.b32.xlu0 %v940, 4
        %v957 = vpop.permute.xlu0 %956
        %958 = vrot.lane.b32.xlu0 %v941, 4
        %v959 = vpop.permute.xlu0 %958
        %960 = vrot.lane.b32.xlu0 %v942, 4
        %v961 = vpop.permute.xlu0 %960
        %962 = vrot.lane.b32.xlu0 %v943, 4
        %v963 = vpop.permute.xlu0 %962
        %964 = vrot.lane.b32.xlu0 %v944, 4
        %v965 = vpop.permute.xlu0 %964
        %966 = vrot.lane.b32.xlu0 %v945, 4
        %v967 = vpop.permute.xlu0 %966
        %968 = vrot.lane.b32.xlu0 %v946, 4
        %v969 = vpop.permute.xlu0 %968
        %970 = vrot.lane.b32.xlu0 %v947, 4
        %v971 = vpop.permute.xlu0 %970
        %v972 = vsel %vm730, %v957, %v959
        %v973 = vsel %vm730, %v961, %v963
        %v974 = vsel %vm730, %v965, %v967
        %v975 = vsel %vm730, %v969, %v971
        %v980 = vadd.f32 %v972, %v973
        %v981 = vadd.f32 %v980, %v974
        %v982 = vadd.f32 %v981, %v975
        %983 = vadd.xlane.f32.xlu0 %v982
        %v984 = vpop.xlane.xlu0 %983
        %v985 = vrot.slane %v984, 4
        %v986 = vadd.f32 %v984, %v985
        %v987 = vrot.slane %v986, 2
        %v988 = vadd.f32 %v986, %v987
        %v989 = vrot.slane %v988, 1
        %v990 = vadd.f32 %v988, %v989
        %s991 = vtos %v990
        %v992 = vmul.f32 %v940, %v940
        %v993 = vmul.f32 %v941, %v941
        %v994 = vmul.f32 %v942, %v942
        %v995 = vmul.f32 %v943, %v943
        %v996 = vmul.f32 %v944, %v944
        %v997 = vmul.f32 %v945, %v945
        %v998 = vmul.f32 %v946, %v946
        %v999 = vmul.f32 %v947, %v947
        %1008 = vrot.lane.b32.xlu0 %v992, 4
        %v1009 = vpop.permute.xlu0 %1008
        %1010 = vrot.lane.b32.xlu0 %v993, 4
        %v1011 = vpop.permute.xlu0 %1010
        %1012 = vrot.lane.b32.xlu0 %v994, 4
        %v1013 = vpop.permute.xlu0 %1012
        %1014 = vrot.lane.b32.xlu0 %v995, 4
        %v1015 = vpop.permute.xlu0 %1014
        %1016 = vrot.lane.b32.xlu0 %v996, 4
        %v1017 = vpop.permute.xlu0 %1016
        %1018 = vrot.lane.b32.xlu0 %v997, 4
        %v1019 = vpop.permute.xlu0 %1018
        %1020 = vrot.lane.b32.xlu0 %v998, 4
        %v1021 = vpop.permute.xlu0 %1020
        %1022 = vrot.lane.b32.xlu0 %v999, 4
        %v1023 = vpop.permute.xlu0 %1022
        %v1024 = vsel %vm730, %v1009, %v1011
        %v1025 = vsel %vm730, %v1013, %v1015
        %v1026 = vsel %vm730, %v1017, %v1019
        %v1027 = vsel %vm730, %v1021, %v1023
        %v1032 = vadd.f32 %v1024, %v1025
        %v1033 = vadd.f32 %v1032, %v1026
        %v1034 = vadd.f32 %v1033, %v1027
        %1035 = vadd.xlane.f32.xlu0 %v1034
        %v1036 = vpop.xlane.xlu0 %1035
        %v1037 = vrot.slane %v1036, 4
        %v1038 = vadd.f32 %v1036, %v1037
        %v1039 = vrot.slane %v1038, 2
        %v1040 = vadd.f32 %v1038, %v1039
        %v1041 = vrot.slane %v1040, 1
        %v1042 = vadd.f32 %v1040, %v1041
        %s1043 = vtos %v1042
        %s1044 = smul.f32 %s991, 0.0007142857
        %s1045 = smul.f32 %s1043, 0.0007142857
        %s1046 = smul.f32 %s1044, %s1044
        %s1047 = ssub.f32 %s1045, %s1046
        %s1048 = smax.f32 %s1047, 0.0
        %s1049 = sadd.f32 %s1048, 1e-08
        %v1050 = vstv %s1049
        %v1051 = vrsqrt.pop %v1050
        %s1052 = vtos %v1051
        %v1053 = vld [vmem:[%s7] sm:$0xff]
        %v1054 = vld [vmem:[%s7 + $0x8] sm:$0xff]
        %v1055 = vld [vmem:[%s7 + $0x10] sm:$0xff]
        %v1056 = vld [vmem:[%s7 + $0x18] sm:$0xff]
        %v1057 = vstv %s1044
        %v1058 = vsub.f32 %v928, %v1057
        %v1059 = vsub.f32 %v929, %v1057
        %v1060 = vsub.f32 %v930, %v1057
        %v1061 = vsub.f32 %v931, %v1057
        %v1062 = vsub.f32 %v932, %v1057
        %v1063 = vsub.f32 %v933, %v1057
        %v1064 = vsub.f32 %v934, %v1057
        %v1065 = vsub.f32 %v935, %v1057
        %v1066 = vstv %s1052
        %v1067 = vmul.f32 %v1058, %v1066
        %v1068 = vmul.f32 %v1059, %v1066
        %v1069 = vmul.f32 %v1060, %v1066
        %v1070 = vmul.f32 %v1061, %v1066
        %v1071 = vmul.f32 %v1062, %v1066
        %v1072 = vmul.f32 %v1063, %v1066
        %v1073 = vmul.f32 %v1064, %v1066
        %v1074 = vmul.f32 %v1065, %v1066
        %1076 = vset.pattern.permute.xlu0 0
        %1077 = vperm.xlu0 %1076, %v1053
        %v1078 = vpop.permute.xlu0 %1077
        %1081 = vset.pattern.permute.xlu0 0
        %1082 = vperm.xlu0 %1081, %v1054
        %v1083 = vpop.permute.xlu0 %1082
        %1086 = vset.pattern.permute.xlu0 0
        %1087 = vperm.xlu0 %1086, %v1055
        %v1088 = vpop.permute.xlu0 %1087
        %1091 = vset.pattern.permute.xlu0 0
        %1092 = vperm.xlu0 %1091, %v1056
        %v1093 = vpop.permute.xlu0 %1092
        %v1095 = vmul.f32 %v1078, %v1067
        %v1096 = vmul.f32 %v1078, %v1068
        %v1097 = vmul.f32 %v1083, %v1069
        %v1098 = vmul.f32 %v1083, %v1070
        %v1099 = vmul.f32 %v1088, %v1071
        %v1100 = vmul.f32 %v1088, %v1072
        %v1101 = vmul.f32 %v1093, %v1073
        %v1102 = vmul.f32 %v1093, %v1074
        %v1103 = vld [vmem:[%s8] sm:$0xff]
        %v1104 = vld [vmem:[%s8 + $0x8] sm:$0xff]
        %v1105 = vld [vmem:[%s8 + $0x10] sm:$0xff]
        %v1106 = vld [vmem:[%s8 + $0x18] sm:$0xff]
        %1108 = vset.pattern.permute.xlu0 0
        %1109 = vperm.xlu0 %1108, %v1103
        %v1110 = vpop.permute.xlu0 %1109
        %1113 = vset.pattern.permute.xlu0 0
        %1114 = vperm.xlu0 %1113, %v1104
        %v1115 = vpop.permute.xlu0 %1114
        %1118 = vset.pattern.permute.xlu0 0
        %1119 = vperm.xlu0 %1118, %v1105
        %v1120 = vpop.permute.xlu0 %1119
        %1123 = vset.pattern.permute.xlu0 0
        %1124 = vperm.xlu0 %1123, %v1106
        %v1125 = vpop.permute.xlu0 %1124
        %v1127 = vadd.f32 %v1095, %v1110
        %v1128 = vadd.f32 %v1096, %v1110
        %v1129 = vadd.f32 %v1097, %v1115
        %v1130 = vadd.f32 %v1098, %v1115
        %v1131 = vadd.f32 %v1099, %v1120
        %v1132 = vadd.f32 %v1100, %v1120
        %v1133 = vadd.f32 %v1101, %v1125
        %v1134 = vadd.f32 %v1102, %v1125
        %vm1135 = vcmp.gt.f32.partialorder %v1127, 0.0
        %vm1136 = vcmp.gt.f32.partialorder %v1128, 0.0
        %vm1137 = vcmp.gt.f32.partialorder %v1129, 0.0
        %vm1138 = vcmp.gt.f32.partialorder %v1130, 0.0
        %vm1139 = vcmp.gt.f32.partialorder %v1131, 0.0
        %vm1140 = vcmp.gt.f32.partialorder %v1132, 0.0
        %vm1141 = vcmp.gt.f32.partialorder %v1133, 0.0
        %vm1142 = vcmp.gt.f32.partialorder %v1134, 0.0
        %v1143 = vmul.f32 %v716, %v1127
        %v1144 = vmul.f32 %v716, %v1128
        %v1145 = vmul.f32 %v716, %v1129
        %v1146 = vmul.f32 %v716, %v1130
        %v1147 = vmul.f32 %v716, %v1131
        %v1148 = vmul.f32 %v716, %v1132
        %v1149 = vmul.f32 %v716, %v1133
        %v1150 = vmul.f32 %v716, %v1134
        %v1151 = vsel %vm1135, %v1127, %v1143
        %v1152 = vsel %vm1136, %v1128, %v1144
        %v1153 = vsel %vm1137, %v1129, %v1145
        %v1154 = vsel %vm1138, %v1130, %v1146
        %v1155 = vsel %vm1139, %v1131, %v1147
        %v1156 = vsel %vm1140, %v1132, %v1148
        %v1157 = vsel %vm1141, %v1133, %v1149
        %v1158 = vsel %vm1142, %v1134, %v1150
        %v1159 = vld [vmem:[%s9] sm:$0xf]
        %v1160 = vld [vmem:[%s9 + $0x4] sm:$0xf]
        %v1161 = vld [vmem:[%s9 + $0x8] sm:$0xf]
        %v1162 = vld [vmem:[%s9 + $0xc] sm:$0xf]
        %v1163 = vld [vmem:[%s9 + $0x10] sm:$0xf]
        %v1164 = vld [vmem:[%s9 + $0x14] sm:$0xf]
        %v1165 = vpack.c.bf16 %v1153, %v1151
        %v1166 = vpack.c.bf16 %v1154, %v1152
        %v1167 = vpack.c.bf16 %v1157, %v1155
        %v1168 = vpack.c.bf16 %v1158, %v1156
        %v1169 = vld [vmem:[%s10] sm:$0xff]
        %v1170 = vld [vmem:[%s10 + $0x8] sm:$0xff]
        %v1171 = vld [vmem:[%s10 + $0x10] sm:$0xff]
        %v1172 = vld [vmem:[%s10 + $0x18] sm:$0xff]
        %v1173 = vld [vmem:[%s10 + $0x20] sm:$0xff]
        %v1174 = vld [vmem:[%s10 + $0x28] sm:$0xff]
        %1176 = vset.pattern.permute.xlu0 0
        %1177 = vperm.xlu0 %1176, %v1169
        %v1178 = vpop.permute.xlu0 %1177
        %1181 = vset.pattern.permute.xlu0 0
        %1182 = vperm.xlu0 %1181, %v1170
        %v1183 = vpop.permute.xlu0 %1182
        %1186 = vset.pattern.permute.xlu0 0
        %1187 = vperm.xlu0 %1186, %v1171
        %v1188 = vpop.permute.xlu0 %1187
        %1191 = vset.pattern.permute.xlu0 0
        %1192 = vperm.xlu0 %1191, %v1172
        %v1193 = vpop.permute.xlu0 %1192
        %1196 = vset.pattern.permute.xlu0 0
        %1197 = vperm.xlu0 %1196, %v1173
        %v1198 = vpop.permute.xlu0 %1197
        %1201 = vset.pattern.permute.xlu0 0
        %1202 = vperm.xlu0 %1201, %v1174
        %v1203 = vpop.permute.xlu0 %1202
        %v1211 = vunpack.c.l.b16 %v1159
        %v1212 = vunpack.c.l.b16 %v1160
        %v1213 = vunpack.c.l.b16 %v1161
        %v1214 = vunpack.c.l.b16 %v1162
        %v1215 = vunpack.c.l.b16 %v1163
        %v1216 = vunpack.c.l.b16 %v1164
        %v1217 = vpack.c.b16 %v1212, %v1211
        %v1218 = vpack.c.b16 %v1214, %v1213
        %v1219 = vpack.c.b16 %v1216, %v1215
        %1224 = vrot.lane.b32.xlu0 %v1165, 4
        %v1225 = vpop.permute.xlu0 %1224
        %1226 = vrot.lane.b32.xlu0 %v1166, 4
        %v1227 = vpop.permute.xlu0 %1226
        %1228 = vrot.lane.b32.xlu0 %v1167, 4
        %v1229 = vpop.permute.xlu0 %1228
        %1230 = vrot.lane.b32.xlu0 %v1168, 4
        %v1231 = vpop.permute.xlu0 %1230
        %vm1232 = vcmask 31744
        %v1233 = vsel %vm1232, %v1225, %v1227
        %v1234 = vsel %vm1232, %v1229, %v1231
        %v1238 = vsel %vm512, %v1217, 0
        %v1241 = vsel %vm512, %v1218, 0
        %v1244 = vsel %vm512, %v1219, 0
        %1246 = vmatprep.subr.bf16.mxu0 0
        %1247 = vmatpush1.bf16.msra.mxu0 %v1233
        %1248 = vmatprep.subr.bf16.mxu0 0
        %1249 = vmatpush1.bf16.msra.mxu0 %v1234
        %1250 = vmatprep.subr.bf16.mxu0 0
        %1251 = vmatpush1.bf16.msra.mxu0 0
        %1252 = vmatprep.subr.bf16.mxu0 0
        %1253 = vmatpush1.bf16.msra.mxu0 0
        %1254 = vmatprep.subr.bf16.mxu0 0
        %1255 = vmatpush1.bf16.msra.mxu0 0
        %1256 = vmatprep.subr.bf16.mxu0 0
        %1257 = vmatpush1.bf16.msra.mxu0 0
        %1258 = vmatprep.subr.bf16.mxu0 0
        %1259 = vmatpush1.bf16.msra.mxu0 0
        %1260 = vmatprep.subr.bf16.mxu0 0
        %1261 = vmatpush1.bf16.msra.mxu0 0
        %1262 = vmatprep.subr.bf16.mxu0 0
        %1263 = vmatpush1.bf16.msra.mxu0 0
        %1264 = vmatprep.subr.bf16.mxu0 0
        %1265 = vmatpush1.bf16.msra.mxu0 0
        %1266 = vmatprep.subr.bf16.mxu0 0
        %1267 = vmatpush1.bf16.msra.mxu0 0
        %1268 = vmatprep.subr.bf16.mxu0 0
        %1269 = vmatpush1.bf16.msra.mxu0 0
        %1270 = vmatprep.subr.bf16.mxu0 0
        %1271 = vmatpush1.bf16.msra.mxu0 0
        %1272 = vmatprep.subr.bf16.mxu0 0
        %1273 = vmatpush1.bf16.msra.mxu0 0
        %1274 = vmatprep.subr.bf16.mxu0 0
        %1275 = vmatpush1.bf16.msra.mxu0 0
        %1276 = vmatprep.subr.bf16.mxu0 0
        %1277 = vmatpush1.bf16.msra.mxu0 0
        %1278 = vmatprep.mubr.bf16.mxu0 0
        %1279 = vmatmul.mubr.bf16.gmra.mrb[0].mxu0 %v1238
        %v1280 = vpop.f32.mrb[0].mxu0
        %v1281 = vadd.f32 %v1178, %v1280
        %v1282 = vpop.f32.mrb[0].mxu0
        %v1283 = vpop.f32.mrb[0].mxu0
        %v1284 = vadd.f32 %v1183, %v1283
        %v1285 = vpop.f32.mrb[0].mxu0
        %1286 = vmatprep.mubr.bf16.mxu0 0
        %1287 = vmatmul.mubr.bf16.gmra.mrb[0].mxu0 %v1241
        %v1288 = vpop.f32.mrb[0].mxu0
        %v1289 = vadd.f32 %v1188, %v1288
        %v1290 = vpop.f32.mrb[0].mxu0
        %v1291 = vpop.f32.mrb[0].mxu0
        %v1292 = vadd.f32 %v1193, %v1291
        %v1293 = vpop.f32.mrb[0].mxu0
        %1294 = vmatprep.mubr.bf16.mxu0 0
        %1295 = vmatmul.mubr.bf16.gmra.mrb[0].mxu0 %v1244
        %v1296 = vpop.f32.mrb[0].mxu0
        %v1297 = vadd.f32 %v1198, %v1296
        %v1298 = vpop.f32.mrb[0].mxu0
        %v1299 = vpop.f32.mrb[0].mxu0
        %v1300 = vadd.f32 %v1203, %v1299
        %v1301 = vpop.f32.mrb[0].mxu0
        %1302 = vdwg.mxu0
        %1303 = vst [vmem:[%s438] sm:$0xff] %v1281
        %1304 = vst [vmem:[%s438 + $0x8] sm:$0xff] %v1284
        %1305 = vst [vmem:[%s438 + $0x10] sm:$0xff] %v1289
        %1306 = vst [vmem:[%s438 + $0x18] sm:$0xff] %v1292
        %1307 = vst [vmem:[%s445] sm:$0xff] %v1297
        %1308 = vst [vmem:[%s445 + $0x8] sm:$0xff] %v1300
        %s1309 = sand.u32 %s297, 1
        %s1310 = scalar_lea.sflag [#allocation5], %s1309
        %s1311 = sand.u32 %s297, 1
        %s1312 = smul.addr %s1311, 32
        %s1313 = scalar_lea.vmem [#allocation4], %s1312
        %s1314 = sand.u32 %s323, 1
        %s1315 = scalar_lea.sflag [#allocation7], %s1314
        %s1316 = sand.u32 %s323, 1
        %s1317 = smul.addr %s1316, 16
        %s1318 = scalar_lea.vmem [#allocation6], %s1317
        // Predicated region
        $region69: #{tpu_custom_call.1} parent=67 // pred_check
          %p1319 = pneg %p307
        $region70: #{tpu_custom_call.1} parent=67 // pred_check_branch
          %1321 = sbr.rel (%p1319) target = $region72
        $region71: #{tpu_custom_call.1} parent=67 // pred_region
          %s1323 = ssub.s32 512, 512
          %1324 = vsyncadd %s1310, %s1323
          %s1325 = smul.addr %s32, 4
          %s1326 = smul.addr %s1325, 128
          %s1327 = scalar_lea.hbm %s12, %s1326
          %s1328 = sshll.u32 %s1313, 4
          %s1329 = int_to_ptr.vmem [resolvable:$true] %s1328
          %1334 = dma.vmem_to_hbm [thread:$0]  %s1329, 512, %s1327, %s1310, 128, 128, 8
        $region72: #{tpu_custom_call.1} parent=67 // pred_fallthru
          _
        // Predicated region
        $region73: #{tpu_custom_call.1} parent=67 // pred_check
          %p1335 = pneg %p333
        $region74: #{tpu_custom_call.1} parent=67 // pred_check_branch
          %1337 = sbr.rel (%p1335) target = $region76
        $region75: #{tpu_custom_call.1} parent=67 // pred_region
          %s1339 = ssub.s32 256, 256
          %1340 = vsyncadd %s1315, %s1339
          %s1341 = smul.addr %s32, 2
          %s1342 = smul.addr %s1341, 128
          %s1343 = scalar_lea.hbm %s13, %s1342
          %s1344 = sshll.u32 %s1318, 4
          %s1345 = int_to_ptr.vmem [resolvable:$true] %s1344
          %1350 = dma.vmem_to_hbm [thread:$0]  %s1345, 256, %s1343, %s1315, 128, 128, 8
        $region76: #{tpu_custom_call.1} parent=67 // pred_fallthru
          _
      $region68: #{tpu_custom_call.1} parent=5 // pred_fallthru
        _
      %p1351 = scmp.le.s32.totalorder 2, %s27
      // Predicated region
      $region77: #{tpu_custom_call.1} parent=5 // pred_check
        %p1352 = pneg %p1351
      $region78: #{tpu_custom_call.1} parent=5 // pred_check_branch
        %1354 = sbr.rel (%p1352) target = $region80
      $region79: #{tpu_custom_call.1} parent=5 // pred_region
        %s1355 = ssub.s32 %s27, 2
        // Predicated region
        $region81: #{tpu_custom_call.1} parent=79 // pred_check
          %p1356 = pneg %p313
        $region82: #{tpu_custom_call.1} parent=79 // pred_check_branch
          %1358 = sbr.rel (%p1356) target = $region84
        $region83: #{tpu_custom_call.1} parent=79 // pred_region
          %s1359 = sand.u32 %s298, 1
          %s1360 = scalar_lea.sflag [#allocation5], %s1359
          %s1361 = sand.u32 %s298, 1
          %s1362 = smul.addr %s1361, 32
          %s1363 = scalar_lea.vmem [#allocation4], %s1362
          %1364 = dma.done %s1360, 512
        $region84: #{tpu_custom_call.1} parent=79 // pred_fallthru
          _
        // Predicated region
        $region85: #{tpu_custom_call.1} parent=79 // pred_check
          %p1365 = pneg %p339
        $region86: #{tpu_custom_call.1} parent=79 // pred_check_branch
          %1367 = sbr.rel (%p1365) target = $region88
        $region87: #{tpu_custom_call.1} parent=79 // pred_region
          %s1368 = sand.u32 %s324, 1
          %s1369 = scalar_lea.sflag [#allocation7], %s1368
          %s1370 = sand.u32 %s324, 1
          %s1371 = smul.addr %s1370, 16
          %s1372 = scalar_lea.vmem [#allocation6], %s1371
          %1373 = dma.done %s1369, 256
        $region88: #{tpu_custom_call.1} parent=79 // pred_fallthru
          _
      $region80: #{tpu_custom_call.1} parent=5 // pred_fallthru
        _
    $region6: #{tpu_custom_call.1} parent=1 // loop_footer
      %s31 = sadd.s32 1, %s27
    $region7: #{tpu_custom_call.1} parent=1 // loop_footer_branch
      %26 = sbr.rel target = $region3
    $region8: #{tpu_custom_call.1} parent=1 // loop_exit
      _
    %1374 = vsyncpa [#allocation5], 1
    %s1375 = scalar_lea.sflag [#allocation5], 1
    %1376 = vsyncpa %s1375, 1
    %1377 = vsyncpa [#allocation7], 1
    %s1378 = scalar_lea.sflag [#allocation7], 1
    %1379 = vsyncpa %s1378, 1

</llo_original>
